<compile_context>
chip_gen: v6e
topology: v6e:2x2x1
jax: 0.10.0
libtpu: 0.0.40
codegen_flags: <defaults>
</compile_context>

<pallas_src>
import functools
import math

import jax
import jax.numpy as jnp
from jax.experimental import pallas as pl
from jax.experimental.pallas import tpu as pltpu

_LANE = 128  # TPU vreg lane width; all feature dims zero-padded to a multiple.


# ---------------------------------------------------------------------------
# Static execution plan (shared by parameter builders and the kernel)
# ---------------------------------------------------------------------------

def _make_plan(block_layers, num_init_input, num_classes):
    """Execution-ordered op list.

    Entries:
      ("head", din, dout)        linear0 -> norm0 -> relu0
      ("dense", d)               _DenseLayer on width d (concat -> 2d)
      ("transition", din, dout)  linear -> norm -> relu
      ("norm5", d)               norm5 -> top-level F.relu
      ("clf", din, dout)         classifier linear

    Width doubles per dense layer (the actual data flow of the module; the
    module's own `num_layer ** 2` bookkeeping coincides with this for the
    2-layer blocks used here — the only configuration that runs in PyTorch).
    """
    plan = []
    d = num_init_input
    max_w = max(d, num_classes)
    plan.append(("head", d, d))
    for bi, num_layer in enumerate(block_layers):
        for _ in range(num_layer):
            plan.append(("dense", d))
            d *= 2
            max_w = max(max_w, d)
        if bi != len(block_layers) - 1:
            plan.append(("transition", d, d // 8))
            d //= 8
    plan.append(("norm5", d))
    plan.append(("clf", d, num_classes))
    return plan, max_w


# ---------------------------------------------------------------------------
# Native parameters (deterministic, mirrors the PyTorch module init)
# ---------------------------------------------------------------------------

def make_native_params(key, plan):
    counter = [0]

    def nk():
        counter[0] += 1
        return jax.random.fold_in(key, counter[0])

    def lin(din, dout):
        # PyTorch default Linear weight init U(-1/sqrt(din), 1/sqrt(din)); the
        # module's init loop zeroes every Linear bias.
        bound = 1.0 / math.sqrt(din)
        w = jax.random.uniform(nk(), (dout, din), jnp.float32, -bound, bound)
        b = jnp.zeros((dout,), jnp.float32)
        return w, b

    def bn(dfeat, eps=1e-5):
        # gamma=1, beta=0, running_mean=0, running_var=1 (module init), eval.
        gamma = jnp.ones((dfeat,), jnp.float32)
        beta = jnp.zeros((dfeat,), jnp.float32)
        mean = jnp.zeros((dfeat,), jnp.float32)
        var = jnp.ones((dfeat,), jnp.float32)
        sc = gamma / jnp.sqrt(var + eps)
        sh = beta - mean * sc
        return sc, sh

    native = []
    for op in plan:
        kind = op[0]
        if kind in ("head", "transition"):
            _, din, dout = op
            w, b = lin(din, dout)
            sc, sh = bn(dout)
            native.append(dict(kind=kind, w=w, b=b, sc=sc, sh=sh))
        elif kind == "dense":
            d = op[1]
            w1, b1 = lin(d, d)
            s1, t1 = bn(d)
            w2, b2 = lin(d, d)
            s2, t2 = bn(d)
            native.append(dict(kind=kind, d=d, w1=w1, b1=b1, s1=s1, t1=t1,
                               w2=w2, b2=b2, s2=s2, t2=t2))
        elif kind == "norm5":
            d = op[1]
            sc, sh = bn(d)
            native.append(dict(kind=kind, d=d, sc=sc, sh=sh))
        elif kind == "clf":
            _, din, dout = op
            w, b = lin(din, dout)
            native.append(dict(kind=kind, w=w, b=b))
    return native


# ---------------------------------------------------------------------------
# Pure-JAX reference forward (original / unfolded parameter space, f32)
# ---------------------------------------------------------------------------

def reference_forward(native, x):
    h = x
    for st in native:
        kind = st["kind"]
        if kind in ("head", "transition"):
            z = h @ st["w"].T + st["b"]
            h = jnp.maximum(z * st["sc"] + st["sh"], 0.0)
        elif kind == "dense":
            y = jnp.maximum(h @ st["w1"].T + st["b1"], 0.0) * st["s1"] + st["t1"]
            out = jnp.maximum(y @ st["w2"].T + st["b2"], 0.0) * st["s2"] + st["t2"]
            h = jnp.concatenate([h, out], axis=1)   # dropout identity (eval)
        elif kind == "norm5":
            h = jnp.maximum(h * st["sc"] + st["sh"], 0.0)   # norm5 + F.relu
        elif kind == "clf":
            h = h @ st["w"].T + st["b"]
    return h


# ---------------------------------------------------------------------------
# Parameter packing: pre-transposed, lane-placed, affine-folded, bf16 weights
# ---------------------------------------------------------------------------

def pack_params(native, lanes, w_dtype=jnp.bfloat16):
    def pad_w(w_t, col_off):
        # w_t is already (din, dout); place at rows [0,din), cols [off,off+dout).
        din, dout = w_t.shape
        out = jnp.zeros((lanes, lanes), jnp.float32)
        return out.at[:din, col_off:col_off + dout].set(w_t)

    def pad_v(v, off):
        out = jnp.zeros((lanes,), jnp.float32)
        return out.at[off:off + v.shape[0]].set(v)

    Ws, Vs = [], []
    for st in native:
        kind = st["kind"]
        if kind in ("head", "transition"):
            # relu((h@W.T + b)*sc + sh) == relu(h @ (W.T*sc) + (b*sc + sh))
            Ws.append(pad_w(st["w"].T * st["sc"][None, :], 0))
            Vs.append(pad_v(st["b"] * st["sc"] + st["sh"], 0))
        elif kind == "dense":
            d = st["d"]
            # sublayer1: kernel computes y' = relu(h@W1.T + b1); its BN (s1,t1)
            # is folded forward into W2 / b2.
            Ws.append(pad_w(st["w1"].T, 0))
            Vs.append(pad_v(st["b1"], 0))
            # sublayer2 (folded): out = relu(y' @ (s1*W2).T + (b2 + W2@t1)) * s2 + t2
            # and the whole thing is placed at lane offset d so that the concat
            # torch.cat([x, out], dim=1) becomes `h + out`.
            w2_fold = (st["w2"] * st["s1"][None, :]).T
            b2_fold = st["b2"] + st["w2"] @ st["t1"]
            Ws.append(pad_w(w2_fold, d))
            Vs.append(pad_v(b2_fold, d))
            Vs.append(pad_v(st["s2"], d))
            Vs.append(pad_v(st["t2"], d))
        elif kind == "norm5":
            Vs.append(pad_v(st["sc"], 0))
            Vs.append(pad_v(st["sh"], 0))
        elif kind == "clf":
            Ws.append(pad_w(st["w"].T, 0))
            Vs.append(pad_v(st["b"], 0))

    return {
        "W": jnp.stack(Ws).astype(w_dtype),      # (n_mm, lanes, lanes)  bf16
        "V": jnp.stack(Vs).astype(jnp.float32),  # (n_vec, lanes)        f32
    }


# ---------------------------------------------------------------------------
# The fused kernel: whole forward pass on one 128-row batch tile
# ---------------------------------------------------------------------------

def _densenet_kernel(x_ref, w_ref, v_ref, o_ref, *, plan, w_dtype):
    f32 = jnp.float32
    h = x_ref[...].astype(f32)          # (bt, lanes), zero-padded input tile

    wi = 0  # matmul / weight index
    vi = 0  # vector-row index

    def mm(a, i):
        # bf16 x bf16 matmul on the MXU with f32 accumulation; weights were
        # pre-transposed and lane-placed at pack time (no .T, lane-dense).
        return jnp.dot(a.astype(w_dtype), w_ref[i], preferred_element_type=f32)

    def vec(i):
        return v_ref[i:i + 1, :]        # static (1, lanes) f32 row, lane-dense

    for op in plan:                     # static Python unroll at trace time
        kind = op[0]
        if kind in ("head", "transition"):
            # Linear -> BN -> ReLU (BN scale folded into W, bias into shift)
            h = jnp.maximum(mm(h, wi) + vec(vi), 0.0)
            wi += 1
            vi += 1
        elif kind == "dense":
            # _DenseLayer: (Linear -> ReLU -> BN) x 2; first BN folded into the
            # second matmul's weights/bias at pack time.
            y = jnp.maximum(mm(h, wi) + vec(vi), 0.0)
            wi += 1
            vi += 1
            out = (jnp.maximum(mm(y, wi) + vec(vi), 0.0)
                   * vec(vi + 1) + vec(vi + 2))
            wi += 1
            vi += 3
            # dropout: identity at inference; concat == add (disjoint lane bands)
            h = h + out
        elif kind == "norm5":
            h = jnp.maximum(h * vec(vi) + vec(vi + 1), 0.0)  # norm5 + F.relu
            vi += 2
        elif kind == "clf":
            h = mm(h, wi) + vec(vi)
            wi += 1
            vi += 1

    o_ref[...] = h.astype(o_ref.dtype)  # single lane-dense store


# ---------------------------------------------------------------------------
# Forward wrapper: batch-parallel grid, weights resident across grid steps
# ---------------------------------------------------------------------------

def densenet_forward(params, x, *, plan, batch_tile=128):
    W, V = params["W"], params["V"]
    lanes = W.shape[-1]
    B, d0 = x.shape
    num_classes = plan[-1][2]

    # Pad batch to a multiple of the tile and features to the lane width.
    n_tiles = pl.cdiv(B, batch_tile)
    Bp = n_tiles * batch_tile
    x_pad = jnp.zeros((Bp, lanes), jnp.float32).at[:B, :d0].set(
        x.astype(jnp.float32))

    kernel = functools.partial(_densenet_kernel, plan=plan, w_dtype=W.dtype)

    out_pad = pl.pallas_call(
        kernel,
        out_shape=jax.ShapeDtypeStruct((Bp, lanes), jnp.float32),
        grid=(n_tiles,),
        in_specs=[
            pl.BlockSpec((batch_tile, lanes), lambda i: (i, 0)),
            # Constant block index: weights / vectors fetched once and kept
            # VMEM-resident across all batch tiles (~360 KiB bf16 + ~11 KiB).
            pl.BlockSpec(W.shape, lambda i: (0, 0, 0)),
            pl.BlockSpec(V.shape, lambda i: (0, 0)),
        ],
        out_specs=pl.BlockSpec((batch_tile, lanes), lambda i: (i, 0)),
        compiler_params=pltpu.CompilerParams(
            dimension_semantics=("parallel",)),
    )(x_pad, W, V)

    return out_pad[:B, :num_classes]


# ---------------------------------------------------------------------------
# Main
# ---------------------------------------------------------------------------

if __name__ == "__main__":
    # DenseNet(block_layers=(2, 2), num_init_input=32, drop_rate=0.0,
    #          num_classes=10, growth_rate=..., bn_size=...)  (last two unused)
    block_layers = (2, 2)
    num_init_input = 32
    num_classes = 10
    batch = 256        # per perf review: fill MXU rows; 2 x 128-row tiles
    batch_tile = 128   # caps live activations under the 64-vreg file (f32)

    key = jax.random.PRNGKey(0)
    pkey, xkey = jax.random.split(key)

    plan, max_w = _make_plan(block_layers, num_init_input, num_classes)
    lanes = max(_LANE, ((max_w + _LANE - 1) // _LANE) * _LANE)

    native = make_native_params(pkey, plan)
    params = pack_params(native, lanes, w_dtype=jnp.bfloat16)

    x = jax.random.normal(xkey, (batch, num_init_input), jnp.float32)

    fwd = jax.jit(functools.partial(densenet_forward, plan=plan,
                                    batch_tile=batch_tile))
    out = jax.block_until_ready(fwd(params, x))

    # Validate against a pure-JAX f32 reference in the original (unfolded)
    # parameter space; catches any corruption of the implicit concat (padded
    # lanes must stay zero) and bounds the bf16-chain rounding (11 matmuls).
    ref = reference_forward(native, x)

    assert out.shape == (batch, num_classes), out.shape
    assert bool(jnp.all(jnp.isfinite(out)))
    max_err = float(jnp.max(jnp.abs(out - ref)))
    assert bool(jnp.allclose(out, ref, rtol=5e-2, atol=5e-2)), max_err
    print("KERNEL_OK")
</pallas_src>

<mosaic_0001>
module attributes {stable_mosaic.version = 11 : i64} {
  func.func @_densenet_kernel(%arg0: i32, %arg1: memref<128x128xf32, #tpu.memory_space<vmem>>, %arg2: memref<11x128x128xbf16, #tpu.memory_space<vmem>>, %arg3: memref<21x128xf32, #tpu.memory_space<vmem>>, %arg4: memref<128x128xf32, #tpu.memory_space<vmem>>) attributes {dimension_semantics = [#tpu.dimension_semantics<parallel>], iteration_bounds = array<i64: 2>, scalar_prefetch = 0 : i64, scratch_operands = 0 : i64, tpu.core_type = #tpu.core_type<tc>, window_params = [{transform_indices = @transform_0, window_bounds = array<i64: 128, 128>}, {pipeline_mode = #tpu.pipeline_mode<synchronous>, transform_indices = @transform_1, window_bounds = array<i64: 11, 128, 128>}, {pipeline_mode = #tpu.pipeline_mode<synchronous>, transform_indices = @transform_2, window_bounds = array<i64: 21, 128>}, {transform_indices = @transform_3, window_bounds = array<i64: 128, 128>}]} {
    %c0 = arith.constant 0 : index
    %c0_0 = arith.constant 0 : index
    %0 = vector.load %arg1[%c0, %c0_0] : memref<128x128xf32, #tpu.memory_space<vmem>>, vector<128x128xf32>
    %1 = arith.truncf %0 : vector<128x128xf32> to vector<128x128xbf16>
    %c0_1 = arith.constant 0 : index
    %c0_2 = arith.constant 0 : index
    %c0_3 = arith.constant 0 : index
    %2 = vector.load %arg2[%c0_1, %c0_2, %c0_3] : memref<11x128x128xbf16, #tpu.memory_space<vmem>>, vector<1x128x128xbf16>
    %3 = vector.shape_cast %2 : vector<1x128x128xbf16> to vector<128x128xbf16>
    %cst = arith.constant dense<0.000000e+00> : vector<128x128xf32>
    %4 = tpu.matmul %1, %3, %cst {dimension_numbers = #tpu.dot_dimension_numbers<[1], [0], [0], [1], [0, 0, 1, 1], [], []>} : vector<128x128xbf16>, vector<128x128xbf16>, vector<128x128xf32> -> vector<128x128xf32>
    %c0_4 = arith.constant 0 : index
    %c0_5 = arith.constant 0 : index
    %5 = vector.load %arg3[%c0_4, %c0_5] : memref<21x128xf32, #tpu.memory_space<vmem>>, vector<1x128xf32>
    %6 = vector.broadcast %5 : vector<1x128xf32> to vector<128x128xf32>
    %7 = arith.addf %4, %6 : vector<128x128xf32>
    %cst_6 = arith.constant 0.000000e+00 : f32
    %8 = vector.broadcast %cst_6 : f32 to vector<128x128xf32>
    %9 = arith.maximumf %7, %8 : vector<128x128xf32>
    %10 = arith.truncf %9 : vector<128x128xf32> to vector<128x128xbf16>
    %c1 = arith.constant 1 : index
    %c0_7 = arith.constant 0 : index
    %c0_8 = arith.constant 0 : index
    %11 = vector.load %arg2[%c1, %c0_7, %c0_8] : memref<11x128x128xbf16, #tpu.memory_space<vmem>>, vector<1x128x128xbf16>
    %12 = vector.shape_cast %11 : vector<1x128x128xbf16> to vector<128x128xbf16>
    %cst_9 = arith.constant dense<0.000000e+00> : vector<128x128xf32>
    %13 = tpu.matmul %10, %12, %cst_9 {dimension_numbers = #tpu.dot_dimension_numbers<[1], [0], [0], [1], [0, 0, 1, 1], [], []>} : vector<128x128xbf16>, vector<128x128xbf16>, vector<128x128xf32> -> vector<128x128xf32>
    %c1_10 = arith.constant 1 : index
    %c0_11 = arith.constant 0 : index
    %14 = vector.load %arg3[%c1_10, %c0_11] : memref<21x128xf32, #tpu.memory_space<vmem>>, vector<1x128xf32>
    %15 = vector.broadcast %14 : vector<1x128xf32> to vector<128x128xf32>
    %16 = arith.addf %13, %15 : vector<128x128xf32>
    %cst_12 = arith.constant 0.000000e+00 : f32
    %17 = vector.broadcast %cst_12 : f32 to vector<128x128xf32>
    %18 = arith.maximumf %16, %17 : vector<128x128xf32>
    %19 = arith.truncf %18 : vector<128x128xf32> to vector<128x128xbf16>
    %c2 = arith.constant 2 : index
    %c0_13 = arith.constant 0 : index
    %c0_14 = arith.constant 0 : index
    %20 = vector.load %arg2[%c2, %c0_13, %c0_14] : memref<11x128x128xbf16, #tpu.memory_space<vmem>>, vector<1x128x128xbf16>
    %21 = vector.shape_cast %20 : vector<1x128x128xbf16> to vector<128x128xbf16>
    %cst_15 = arith.constant dense<0.000000e+00> : vector<128x128xf32>
    %22 = tpu.matmul %19, %21, %cst_15 {dimension_numbers = #tpu.dot_dimension_numbers<[1], [0], [0], [1], [0, 0, 1, 1], [], []>} : vector<128x128xbf16>, vector<128x128xbf16>, vector<128x128xf32> -> vector<128x128xf32>
    %c2_16 = arith.constant 2 : index
    %c0_17 = arith.constant 0 : index
    %23 = vector.load %arg3[%c2_16, %c0_17] : memref<21x128xf32, #tpu.memory_space<vmem>>, vector<1x128xf32>
    %24 = vector.broadcast %23 : vector<1x128xf32> to vector<128x128xf32>
    %25 = arith.addf %22, %24 : vector<128x128xf32>
    %cst_18 = arith.constant 0.000000e+00 : f32
    %26 = vector.broadcast %cst_18 : f32 to vector<128x128xf32>
    %27 = arith.maximumf %25, %26 : vector<128x128xf32>
    %c3 = arith.constant 3 : index
    %c0_19 = arith.constant 0 : index
    %28 = vector.load %arg3[%c3, %c0_19] : memref<21x128xf32, #tpu.memory_space<vmem>>, vector<1x128xf32>
    %29 = vector.broadcast %28 : vector<1x128xf32> to vector<128x128xf32>
    %30 = arith.mulf %27, %29 : vector<128x128xf32>
    %c4 = arith.constant 4 : index
    %c0_20 = arith.constant 0 : index
    %31 = vector.load %arg3[%c4, %c0_20] : memref<21x128xf32, #tpu.memory_space<vmem>>, vector<1x128xf32>
    %32 = vector.broadcast %31 : vector<1x128xf32> to vector<128x128xf32>
    %33 = arith.addf %30, %32 : vector<128x128xf32>
    %34 = arith.addf %9, %33 : vector<128x128xf32>
    %35 = arith.truncf %34 : vector<128x128xf32> to vector<128x128xbf16>
    %c3_21 = arith.constant 3 : index
    %c0_22 = arith.constant 0 : index
    %c0_23 = arith.constant 0 : index
    %36 = vector.load %arg2[%c3_21, %c0_22, %c0_23] : memref<11x128x128xbf16, #tpu.memory_space<vmem>>, vector<1x128x128xbf16>
    %37 = vector.shape_cast %36 : vector<1x128x128xbf16> to vector<128x128xbf16>
    %cst_24 = arith.constant dense<0.000000e+00> : vector<128x128xf32>
    %38 = tpu.matmul %35, %37, %cst_24 {dimension_numbers = #tpu.dot_dimension_numbers<[1], [0], [0], [1], [0, 0, 1, 1], [], []>} : vector<128x128xbf16>, vector<128x128xbf16>, vector<128x128xf32> -> vector<128x128xf32>
    %c5 = arith.constant 5 : index
    %c0_25 = arith.constant 0 : index
    %39 = vector.load %arg3[%c5, %c0_25] : memref<21x128xf32, #tpu.memory_space<vmem>>, vector<1x128xf32>
    %40 = vector.broadcast %39 : vector<1x128xf32> to vector<128x128xf32>
    %41 = arith.addf %38, %40 : vector<128x128xf32>
    %cst_26 = arith.constant 0.000000e+00 : f32
    %42 = vector.broadcast %cst_26 : f32 to vector<128x128xf32>
    %43 = arith.maximumf %41, %42 : vector<128x128xf32>
    %44 = arith.truncf %43 : vector<128x128xf32> to vector<128x128xbf16>
    %c4_27 = arith.constant 4 : index
    %c0_28 = arith.constant 0 : index
    %c0_29 = arith.constant 0 : index
    %45 = vector.load %arg2[%c4_27, %c0_28, %c0_29] : memref<11x128x128xbf16, #tpu.memory_space<vmem>>, vector<1x128x128xbf16>
    %46 = vector.shape_cast %45 : vector<1x128x128xbf16> to vector<128x128xbf16>
    %cst_30 = arith.constant dense<0.000000e+00> : vector<128x128xf32>
    %47 = tpu.matmul %44, %46, %cst_30 {dimension_numbers = #tpu.dot_dimension_numbers<[1], [0], [0], [1], [0, 0, 1, 1], [], []>} : vector<128x128xbf16>, vector<128x128xbf16>, vector<128x128xf32> -> vector<128x128xf32>
    %c6 = arith.constant 6 : index
    %c0_31 = arith.constant 0 : index
    %48 = vector.load %arg3[%c6, %c0_31] : memref<21x128xf32, #tpu.memory_space<vmem>>, vector<1x128xf32>
    %49 = vector.broadcast %48 : vector<1x128xf32> to vector<128x128xf32>
    %50 = arith.addf %47, %49 : vector<128x128xf32>
    %cst_32 = arith.constant 0.000000e+00 : f32
    %51 = vector.broadcast %cst_32 : f32 to vector<128x128xf32>
    %52 = arith.maximumf %50, %51 : vector<128x128xf32>
    %c7 = arith.constant 7 : index
    %c0_33 = arith.constant 0 : index
    %53 = vector.load %arg3[%c7, %c0_33] : memref<21x128xf32, #tpu.memory_space<vmem>>, vector<1x128xf32>
    %54 = vector.broadcast %53 : vector<1x128xf32> to vector<128x128xf32>
    %55 = arith.mulf %52, %54 : vector<128x128xf32>
    %c8 = arith.constant 8 : index
    %c0_34 = arith.constant 0 : index
    %56 = vector.load %arg3[%c8, %c0_34] : memref<21x128xf32, #tpu.memory_space<vmem>>, vector<1x128xf32>
    %57 = vector.broadcast %56 : vector<1x128xf32> to vector<128x128xf32>
    %58 = arith.addf %55, %57 : vector<128x128xf32>
    %59 = arith.addf %34, %58 : vector<128x128xf32>
    %60 = arith.truncf %59 : vector<128x128xf32> to vector<128x128xbf16>
    %c5_35 = arith.constant 5 : index
    %c0_36 = arith.constant 0 : index
    %c0_37 = arith.constant 0 : index
    %61 = vector.load %arg2[%c5_35, %c0_36, %c0_37] : memref<11x128x128xbf16, #tpu.memory_space<vmem>>, vector<1x128x128xbf16>
    %62 = vector.shape_cast %61 : vector<1x128x128xbf16> to vector<128x128xbf16>
    %cst_38 = arith.constant dense<0.000000e+00> : vector<128x128xf32>
    %63 = tpu.matmul %60, %62, %cst_38 {dimension_numbers = #tpu.dot_dimension_numbers<[1], [0], [0], [1], [0, 0, 1, 1], [], []>} : vector<128x128xbf16>, vector<128x128xbf16>, vector<128x128xf32> -> vector<128x128xf32>
    %c9 = arith.constant 9 : index
    %c0_39 = arith.constant 0 : index
    %64 = vector.load %arg3[%c9, %c0_39] : memref<21x128xf32, #tpu.memory_space<vmem>>, vector<1x128xf32>
    %65 = vector.broadcast %64 : vector<1x128xf32> to vector<128x128xf32>
    %66 = arith.addf %63, %65 : vector<128x128xf32>
    %cst_40 = arith.constant 0.000000e+00 : f32
    %67 = vector.broadcast %cst_40 : f32 to vector<128x128xf32>
    %68 = arith.maximumf %66, %67 : vector<128x128xf32>
    %69 = arith.truncf %68 : vector<128x128xf32> to vector<128x128xbf16>
    %c6_41 = arith.constant 6 : index
    %c0_42 = arith.constant 0 : index
    %c0_43 = arith.constant 0 : index
    %70 = vector.load %arg2[%c6_41, %c0_42, %c0_43] : memref<11x128x128xbf16, #tpu.memory_space<vmem>>, vector<1x128x128xbf16>
    %71 = vector.shape_cast %70 : vector<1x128x128xbf16> to vector<128x128xbf16>
    %cst_44 = arith.constant dense<0.000000e+00> : vector<128x128xf32>
    %72 = tpu.matmul %69, %71, %cst_44 {dimension_numbers = #tpu.dot_dimension_numbers<[1], [0], [0], [1], [0, 0, 1, 1], [], []>} : vector<128x128xbf16>, vector<128x128xbf16>, vector<128x128xf32> -> vector<128x128xf32>
    %c10 = arith.constant 10 : index
    %c0_45 = arith.constant 0 : index
    %73 = vector.load %arg3[%c10, %c0_45] : memref<21x128xf32, #tpu.memory_space<vmem>>, vector<1x128xf32>
    %74 = vector.broadcast %73 : vector<1x128xf32> to vector<128x128xf32>
    %75 = arith.addf %72, %74 : vector<128x128xf32>
    %cst_46 = arith.constant 0.000000e+00 : f32
    %76 = vector.broadcast %cst_46 : f32 to vector<128x128xf32>
    %77 = arith.maximumf %75, %76 : vector<128x128xf32>
    %78 = arith.truncf %77 : vector<128x128xf32> to vector<128x128xbf16>
    %c7_47 = arith.constant 7 : index
    %c0_48 = arith.constant 0 : index
    %c0_49 = arith.constant 0 : index
    %79 = vector.load %arg2[%c7_47, %c0_48, %c0_49] : memref<11x128x128xbf16, #tpu.memory_space<vmem>>, vector<1x128x128xbf16>
    %80 = vector.shape_cast %79 : vector<1x128x128xbf16> to vector<128x128xbf16>
    %cst_50 = arith.constant dense<0.000000e+00> : vector<128x128xf32>
    %81 = tpu.matmul %78, %80, %cst_50 {dimension_numbers = #tpu.dot_dimension_numbers<[1], [0], [0], [1], [0, 0, 1, 1], [], []>} : vector<128x128xbf16>, vector<128x128xbf16>, vector<128x128xf32> -> vector<128x128xf32>
    %c11 = arith.constant 11 : index
    %c0_51 = arith.constant 0 : index
    %82 = vector.load %arg3[%c11, %c0_51] : memref<21x128xf32, #tpu.memory_space<vmem>>, vector<1x128xf32>
    %83 = vector.broadcast %82 : vector<1x128xf32> to vector<128x128xf32>
    %84 = arith.addf %81, %83 : vector<128x128xf32>
    %cst_52 = arith.constant 0.000000e+00 : f32
    %85 = vector.broadcast %cst_52 : f32 to vector<128x128xf32>
    %86 = arith.maximumf %84, %85 : vector<128x128xf32>
    %c12 = arith.constant 12 : index
    %c0_53 = arith.constant 0 : index
    %87 = vector.load %arg3[%c12, %c0_53] : memref<21x128xf32, #tpu.memory_space<vmem>>, vector<1x128xf32>
    %88 = vector.broadcast %87 : vector<1x128xf32> to vector<128x128xf32>
    %89 = arith.mulf %86, %88 : vector<128x128xf32>
    %c13 = arith.constant 13 : index
    %c0_54 = arith.constant 0 : index
    %90 = vector.load %arg3[%c13, %c0_54] : memref<21x128xf32, #tpu.memory_space<vmem>>, vector<1x128xf32>
    %91 = vector.broadcast %90 : vector<1x128xf32> to vector<128x128xf32>
    %92 = arith.addf %89, %91 : vector<128x128xf32>
    %93 = arith.addf %68, %92 : vector<128x128xf32>
    %94 = arith.truncf %93 : vector<128x128xf32> to vector<128x128xbf16>
    %c8_55 = arith.constant 8 : index
    %c0_56 = arith.constant 0 : index
    %c0_57 = arith.constant 0 : index
    %95 = vector.load %arg2[%c8_55, %c0_56, %c0_57] : memref<11x128x128xbf16, #tpu.memory_space<vmem>>, vector<1x128x128xbf16>
    %96 = vector.shape_cast %95 : vector<1x128x128xbf16> to vector<128x128xbf16>
    %cst_58 = arith.constant dense<0.000000e+00> : vector<128x128xf32>
    %97 = tpu.matmul %94, %96, %cst_58 {dimension_numbers = #tpu.dot_dimension_numbers<[1], [0], [0], [1], [0, 0, 1, 1], [], []>} : vector<128x128xbf16>, vector<128x128xbf16>, vector<128x128xf32> -> vector<128x128xf32>
    %c14 = arith.constant 14 : index
    %c0_59 = arith.constant 0 : index
    %98 = vector.load %arg3[%c14, %c0_59] : memref<21x128xf32, #tpu.memory_space<vmem>>, vector<1x128xf32>
    %99 = vector.broadcast %98 : vector<1x128xf32> to vector<128x128xf32>
    %100 = arith.addf %97, %99 : vector<128x128xf32>
    %cst_60 = arith.constant 0.000000e+00 : f32
    %101 = vector.broadcast %cst_60 : f32 to vector<128x128xf32>
    %102 = arith.maximumf %100, %101 : vector<128x128xf32>
    %103 = arith.truncf %102 : vector<128x128xf32> to vector<128x128xbf16>
    %c9_61 = arith.constant 9 : index
    %c0_62 = arith.constant 0 : index
    %c0_63 = arith.constant 0 : index
    %104 = vector.load %arg2[%c9_61, %c0_62, %c0_63] : memref<11x128x128xbf16, #tpu.memory_space<vmem>>, vector<1x128x128xbf16>
    %105 = vector.shape_cast %104 : vector<1x128x128xbf16> to vector<128x128xbf16>
    %cst_64 = arith.constant dense<0.000000e+00> : vector<128x128xf32>
    %106 = tpu.matmul %103, %105, %cst_64 {dimension_numbers = #tpu.dot_dimension_numbers<[1], [0], [0], [1], [0, 0, 1, 1], [], []>} : vector<128x128xbf16>, vector<128x128xbf16>, vector<128x128xf32> -> vector<128x128xf32>
    %c15 = arith.constant 15 : index
    %c0_65 = arith.constant 0 : index
    %107 = vector.load %arg3[%c15, %c0_65] : memref<21x128xf32, #tpu.memory_space<vmem>>, vector<1x128xf32>
    %108 = vector.broadcast %107 : vector<1x128xf32> to vector<128x128xf32>
    %109 = arith.addf %106, %108 : vector<128x128xf32>
    %cst_66 = arith.constant 0.000000e+00 : f32
    %110 = vector.broadcast %cst_66 : f32 to vector<128x128xf32>
    %111 = arith.maximumf %109, %110 : vector<128x128xf32>
    %c16 = arith.constant 16 : index
    %c0_67 = arith.constant 0 : index
    %112 = vector.load %arg3[%c16, %c0_67] : memref<21x128xf32, #tpu.memory_space<vmem>>, vector<1x128xf32>
    %113 = vector.broadcast %112 : vector<1x128xf32> to vector<128x128xf32>
    %114 = arith.mulf %111, %113 : vector<128x128xf32>
    %c17 = arith.constant 17 : index
    %c0_68 = arith.constant 0 : index
    %115 = vector.load %arg3[%c17, %c0_68] : memref<21x128xf32, #tpu.memory_space<vmem>>, vector<1x128xf32>
    %116 = vector.broadcast %115 : vector<1x128xf32> to vector<128x128xf32>
    %117 = arith.addf %114, %116 : vector<128x128xf32>
    %118 = arith.addf %93, %117 : vector<128x128xf32>
    %c18 = arith.constant 18 : index
    %c0_69 = arith.constant 0 : index
    %119 = vector.load %arg3[%c18, %c0_69] : memref<21x128xf32, #tpu.memory_space<vmem>>, vector<1x128xf32>
    %120 = vector.broadcast %119 : vector<1x128xf32> to vector<128x128xf32>
    %121 = arith.mulf %118, %120 : vector<128x128xf32>
    %c19 = arith.constant 19 : index
    %c0_70 = arith.constant 0 : index
    %122 = vector.load %arg3[%c19, %c0_70] : memref<21x128xf32, #tpu.memory_space<vmem>>, vector<1x128xf32>
    %123 = vector.broadcast %122 : vector<1x128xf32> to vector<128x128xf32>
    %124 = arith.addf %121, %123 : vector<128x128xf32>
    %cst_71 = arith.constant 0.000000e+00 : f32
    %125 = vector.broadcast %cst_71 : f32 to vector<128x128xf32>
    %126 = arith.maximumf %124, %125 : vector<128x128xf32>
    %127 = arith.truncf %126 : vector<128x128xf32> to vector<128x128xbf16>
    %c10_72 = arith.constant 10 : index
    %c0_73 = arith.constant 0 : index
    %c0_74 = arith.constant 0 : index
    %128 = vector.load %arg2[%c10_72, %c0_73, %c0_74] : memref<11x128x128xbf16, #tpu.memory_space<vmem>>, vector<1x128x128xbf16>
    %129 = vector.shape_cast %128 : vector<1x128x128xbf16> to vector<128x128xbf16>
    %cst_75 = arith.constant dense<0.000000e+00> : vector<128x128xf32>
    %130 = tpu.matmul %127, %129, %cst_75 {dimension_numbers = #tpu.dot_dimension_numbers<[1], [0], [0], [1], [0, 0, 1, 1], [], []>} : vector<128x128xbf16>, vector<128x128xbf16>, vector<128x128xf32> -> vector<128x128xf32>
    %c20 = arith.constant 20 : index
    %c0_76 = arith.constant 0 : index
    %131 = vector.load %arg3[%c20, %c0_76] : memref<21x128xf32, #tpu.memory_space<vmem>>, vector<1x128xf32>
    %132 = vector.broadcast %131 : vector<1x128xf32> to vector<128x128xf32>
    %133 = arith.addf %130, %132 : vector<128x128xf32>
    %c0_77 = arith.constant 0 : index
    %c0_78 = arith.constant 0 : index
    %134 = vector.load %arg4[%c0_77, %c0_78] : memref<128x128xf32, #tpu.memory_space<vmem>>, vector<128x128xf32>
    tpu.vector_store %arg4[%c0_77, %c0_78], %133 {strides = array<i32>} : memref<128x128xf32, #tpu.memory_space<vmem>>, vector<128x128xf32>,
    return
  }
  func.func @transform_0(%arg0: i32) -> (i32, i32) {
    %c0_i32 = arith.constant 0 : i32
    %c0_i32_0 = arith.constant 0 : i32
    return %arg0, %c0_i32 : i32, i32
  }
  func.func @transform_1(%arg0: i32) -> (i32, i32, i32) {
    %c0_i32 = arith.constant 0 : i32
    %c0_i32_0 = arith.constant 0 : i32
    %c0_i32_1 = arith.constant 0 : i32
    %c0_i32_2 = arith.constant 0 : i32
    return %c0_i32, %c0_i32_0, %c0_i32_1 : i32, i32, i32
  }
  func.func @transform_2(%arg0: i32) -> (i32, i32) {
    %c0_i32 = arith.constant 0 : i32
    %c0_i32_0 = arith.constant 0 : i32
    %c0_i32_1 = arith.constant 0 : i32
    return %c0_i32, %c0_i32_0 : i32, i32
  }
  func.func @transform_3(%arg0: i32) -> (i32, i32) {
    %c0_i32 = arith.constant 0 : i32
    %c0_i32_0 = arith.constant 0 : i32
    return %arg0, %c0_i32 : i32, i32
  }
}

</mosaic_0001>

<llo_original>
// kernel: densenet_forward.1
$region0: #{densenet_forward.1}
  #allocation0 [shape = 'u32[]', space=smem, size = 0x4, offset = 0x4, fixed_abs, tag = 'smem constant byte address 0x4 - core index']
  #allocation1 [shape = 'u32[144,128]{1,0:T(1,128)}', space=vmem, size = 0x12000, scoped, tag = 'internal scratch']
  %s0 = inlined_call_operand.vmem [shape: f32[256,128], index: 0, kind: input, shape index: {}]
  %s1 = inlined_call_operand.vmem [shape: bf16[11,128,128], index: 1, kind: input, shape index: {}]
  %s2 = inlined_call_operand.vmem [shape: f32[21,128], index: 2, kind: input, shape index: {}]
  %s3 = inlined_call_operand.vmem [shape: f32[256,128], index: 3, kind: output, shape index: {}]
  %s4 = sld [smem:[#allocation0]]
  $region45: #{densenet_forward.1} parent=0
    _
  %s6 = ssub.s32 1, %s4
  %s7 = scalar_select 0, %s6, %s4
  loop: start=0, step=1, limit=4
  $region2: #{densenet_forward.1} parent=0 // loop_pre_header
    _
  $region3: #{densenet_forward.1} parent=0 // loop_header
    %s9 = sphi 0, %s13
    %p10 = scmp.ge.s32.totalorder %s9, 4
    %s19 = sphi 0, %s21
    %s22 = sphi 0, %s19
    %s23 = sphi 0, %s22
    %s39 = sphi 0, %s23
    %s43 = sphi 0, %s43
    %s45 = sphi 0, %s43
    %s46 = sphi 0, %s45
    %s60 = sphi 0, %s46
    %s64 = sphi 0, %s64
    %s66 = sphi 0, %s64
    %s67 = sphi 0, %s66
    %s81 = sphi 0, %s67
    %s87 = sphi 0, %s89
    %s90 = sphi 0, %s87
    %s91 = sphi 0, %s90
    %s107 = sphi 0, %s91
  $region4: #{densenet_forward.1} parent=0 // loop_header_branch
    %12 = sbr.rel (%p10) target = $region8
  $region5: #{densenet_forward.1} parent=0 // loop_body
    %s14 = ssub.s32 %s9, 1
    %s15 = ssub.s32 %s9, 2
    %s16 = sadd.s32 %s9, 1
    %s17 = ssub.s32 %s9, %s16
    %p18 = scmp.eq.s32.totalorder %s17, 0
    %s20 = sadd.s32 %s19, 1
    %s21 = scalar_select %p18, %s19, %s20
    %p24 = pneg %p18
    %p25 = scmp.eq.s32.totalorder %s9, 1
    %p26 = por %p24, %p25
    %p27 = scmp.ne.s32.totalorder %s19, %s22
    %p28 = scmp.eq.s32.totalorder %s9, 0
    %p29 = por %p27, %p28
    %p30 = scmp.ne.s32.totalorder %s19, %s22
    %p31 = scmp.eq.s32.totalorder %s14, 1
    %p32 = por %p30, %p31
    %p33 = scmp.ne.s32.totalorder %s22, %s23
    %p34 = scmp.eq.s32.totalorder %s14, 0
    %p35 = por %p33, %p34
    %p36 = scmp.ne.s32.totalorder %s22, %s23
    %p37 = scmp.eq.s32.totalorder %s15, 1
    %p38 = por %p36, %p37
    %p40 = scmp.ne.s32.totalorder %s23, %s39
    %p41 = scmp.eq.s32.totalorder %s15, 0
    %p42 = por %p40, %p41
    %s44 = sadd.s32 %s43, 1
    %p47 = scmp.eq.s32.totalorder %s9, 1
    %p48 = scmp.ne.s32.totalorder %s43, %s45
    %p49 = scmp.eq.s32.totalorder %s9, 0
    %p50 = por %p48, %p49
    %p51 = scmp.ne.s32.totalorder %s43, %s45
    %p52 = scmp.eq.s32.totalorder %s14, 1
    %p53 = por %p51, %p52
    %p54 = scmp.ne.s32.totalorder %s45, %s46
    %p55 = scmp.eq.s32.totalorder %s14, 0
    %p56 = por %p54, %p55
    %p57 = scmp.ne.s32.totalorder %s45, %s46
    %p58 = scmp.eq.s32.totalorder %s15, 1
    %p59 = por %p57, %p58
    %p61 = scmp.ne.s32.totalorder %s46, %s60
    %p62 = scmp.eq.s32.totalorder %s15, 0
    %p63 = por %p61, %p62
    %s65 = sadd.s32 %s64, 1
    %p68 = scmp.eq.s32.totalorder %s9, 1
    %p69 = scmp.ne.s32.totalorder %s64, %s66
    %p70 = scmp.eq.s32.totalorder %s9, 0
    %p71 = por %p69, %p70
    %p72 = scmp.ne.s32.totalorder %s64, %s66
    %p73 = scmp.eq.s32.totalorder %s14, 1
    %p74 = por %p72, %p73
    %p75 = scmp.ne.s32.totalorder %s66, %s67
    %p76 = scmp.eq.s32.totalorder %s14, 0
    %p77 = por %p75, %p76
    %p78 = scmp.ne.s32.totalorder %s66, %s67
    %p79 = scmp.eq.s32.totalorder %s15, 1
    %p80 = por %p78, %p79
    %p82 = scmp.ne.s32.totalorder %s67, %s81
    %p83 = scmp.eq.s32.totalorder %s15, 0
    %p84 = por %p82, %p83
    %s85 = ssub.s32 %s9, %s16
    %p86 = scmp.eq.s32.totalorder %s85, 0
    %s88 = sadd.s32 %s87, 1
    %s89 = scalar_select %p86, %s87, %s88
    %p92 = pneg %p86
    %p93 = scmp.eq.s32.totalorder %s9, 1
    %p94 = por %p92, %p93
    %p95 = scmp.ne.s32.totalorder %s87, %s90
    %p96 = scmp.eq.s32.totalorder %s9, 0
    %p97 = por %p95, %p96
    %p98 = scmp.ne.s32.totalorder %s87, %s90
    %p99 = scmp.eq.s32.totalorder %s14, 1
    %p100 = por %p98, %p99
    %p101 = scmp.ne.s32.totalorder %s90, %s91
    %p102 = scmp.eq.s32.totalorder %s14, 0
    %p103 = por %p101, %p102
    %p104 = scmp.ne.s32.totalorder %s90, %s91
    %p105 = scmp.eq.s32.totalorder %s15, 1
    %p106 = por %p104, %p105
    %p108 = scmp.ne.s32.totalorder %s91, %s107
    %p109 = scmp.eq.s32.totalorder %s15, 0
    %p110 = por %p108, %p109
    %p111 = scmp.le.s32.totalorder 1, %s9
    %p112 = scmp.lt.s32.totalorder %s9, 3
    %p113 = pnand %p111, %p112
    %p114 = pneg %p113
    // Predicated region
    $region9: #{densenet_forward.1} parent=5 // pred_check
      _
    $region10: #{densenet_forward.1} parent=5 // pred_check_branch
      %116 = sbr.rel (%p113) target = $region12
    $region11: #{densenet_forward.1} parent=5 // pred_region
      %s117 = ssub.s32 %s9, 1
      // Predicated region
      $region13: #{densenet_forward.1} parent=11 // pred_check
        %p118 = pneg %p56
      $region14: #{densenet_forward.1} parent=11 // pred_check_branch
        %120 = sbr.rel (%p118) target = $region16
      $region15: #{densenet_forward.1} parent=11 // pred_region
        _
      $region16: #{densenet_forward.1} parent=11 // pred_fallthru
        _
      // Predicated region
      $region17: #{densenet_forward.1} parent=11 // pred_check
        %p121 = pneg %p77
      $region18: #{densenet_forward.1} parent=11 // pred_check_branch
        %123 = sbr.rel (%p121) target = $region20
      $region19: #{densenet_forward.1} parent=11 // pred_region
        _
      $region20: #{densenet_forward.1} parent=11 // pred_fallthru
        _
    $region12: #{densenet_forward.1} parent=5 // pred_fallthru
      _
    %p124 = scmp.lt.s32.totalorder %s9, 2
    // Predicated region
    $region21: #{densenet_forward.1} parent=5 // pred_check
      %p125 = pneg %p124
    $region22: #{densenet_forward.1} parent=5 // pred_check_branch
      %127 = sbr.rel (%p125) target = $region24
    $region23: #{densenet_forward.1} parent=5 // pred_region
      // Predicated region
      $region25: #{densenet_forward.1} parent=23 // pred_check
        %p128 = pneg %p29
      $region26: #{densenet_forward.1} parent=23 // pred_check_branch
        %130 = sbr.rel (%p128) target = $region28
      $region27: #{densenet_forward.1} parent=23 // pred_region
        %s131 = smul.u32 16, %s9
        %p132 = scmp.lt.s32.totalorder %s131, 31
        %s133 = scalar_select %p132, %s131, 31
        %s134 = smul.addr %s133, 8
        %s135 = scalar_lea.vmem %s0, %s134
        %s136 = smul.u32 16, %s9
      $region28: #{densenet_forward.1} parent=23 // pred_fallthru
        _
    $region24: #{densenet_forward.1} parent=5 // pred_fallthru
      _
    %p137 = scmp.le.s32.totalorder 1, %s9
    %p138 = scmp.lt.s32.totalorder %s9, 3
    %p139 = pnand %p137, %p138
    %p140 = pneg %p139
    // Predicated region
    $region29: #{densenet_forward.1} parent=5 // pred_check
      _
    $region30: #{densenet_forward.1} parent=5 // pred_check_branch
      %142 = sbr.rel (%p139) target = $region32
    $region31: #{densenet_forward.1} parent=5 // pred_region
      %s143 = ssub.s32 %s9, 1
      %s144 = smul.u32 16, %s14
      %p145 = scmp.lt.s32.totalorder %s144, 31
      %s146 = scalar_select %p145, %s144, 31
      %s147 = smul.addr %s146, 8
      %s148 = scalar_lea.vmem %s0, %s147
      %p149 = pneg %p35
      %p150 = pneg %p32
      %p151 = pneg %p56
      %p152 = pneg %p53
      %p153 = pneg %p77
      %p154 = pneg %p74
      %p155 = pneg %p103
      %p156 = pneg %p100
      %s157 = smul.u32 16, %s14
      %p158 = scmp.lt.s32.totalorder %s157, 31
      %s159 = scalar_select %p158, %s157, 31
      %s160 = smul.addr %s159, 8
      %s161 = scalar_lea.vmem %s3, %s160
      %s162 = smul.u32 16, %s14
      %p163 = scmp.lt.s32.totalorder %s162, 31
      %s164 = scalar_select %p163, %s162, 31
      %s165 = smul.addr %s164, 8
      %s166 = scalar_lea.vmem %s0, %s165
      %s167 = smul.u32 16, %s14
      %s168 = smul.u32 16, %s14
      %p169 = scmp.lt.s32.totalorder %s168, 31
      %s170 = scalar_select %p169, %s168, 31
      %s171 = smul.addr %s170, 8
      %s172 = scalar_lea.vmem %s3, %s171
      %s173 = smul.u32 16, %s14
      %v175 = vld [vmem:[%s166] sm:$0xff]
      %v176 = vld [vmem:[%s166 + $0x8] sm:$0xff]
      %v177 = vld [vmem:[%s166 + $0x10] sm:$0xff]
      %v178 = vld [vmem:[%s166 + $0x18] sm:$0xff]
      %v179 = vld [vmem:[%s166 + $0x20] sm:$0xff]
      %v180 = vld [vmem:[%s166 + $0x28] sm:$0xff]
      %v181 = vld [vmem:[%s166 + $0x30] sm:$0xff]
      %v182 = vld [vmem:[%s166 + $0x38] sm:$0xff]
      %v183 = vld [vmem:[%s166 + $0x40] sm:$0xff]
      %v184 = vld [vmem:[%s166 + $0x48] sm:$0xff]
      %v185 = vld [vmem:[%s166 + $0x50] sm:$0xff]
      %v186 = vld [vmem:[%s166 + $0x58] sm:$0xff]
      %v187 = vld [vmem:[%s166 + $0x60] sm:$0xff]
      %v188 = vld [vmem:[%s166 + $0x68] sm:$0xff]
      %v189 = vld [vmem:[%s166 + $0x70] sm:$0xff]
      %v190 = vld [vmem:[%s166 + $0x78] sm:$0xff]
      %v191 = vpack.c.bf16 %v176, %v175
      %v192 = vpack.c.bf16 %v178, %v177
      %v193 = vpack.c.bf16 %v180, %v179
      %v194 = vpack.c.bf16 %v182, %v181
      %v195 = vpack.c.bf16 %v184, %v183
      %v196 = vpack.c.bf16 %v186, %v185
      %v197 = vpack.c.bf16 %v188, %v187
      %v198 = vpack.c.bf16 %v190, %v189
      %v199 = vld [vmem:[%s1] sm:$0xf]
      %v200 = vld [vmem:[%s1 + $0x4] sm:$0xf]
      %v201 = vld [vmem:[%s1 + $0x8] sm:$0xf]
      %v202 = vld [vmem:[%s1 + $0xc] sm:$0xf]
      %v203 = vld [vmem:[%s1 + $0x10] sm:$0xf]
      %v204 = vld [vmem:[%s1 + $0x14] sm:$0xf]
      %v205 = vld [vmem:[%s1 + $0x18] sm:$0xf]
      %v206 = vld [vmem:[%s1 + $0x1c] sm:$0xf]
      %v207 = vld [vmem:[%s1 + $0x20] sm:$0xf]
      %v208 = vld [vmem:[%s1 + $0x24] sm:$0xf]
      %v209 = vld [vmem:[%s1 + $0x28] sm:$0xf]
      %v210 = vld [vmem:[%s1 + $0x2c] sm:$0xf]
      %v211 = vld [vmem:[%s1 + $0x30] sm:$0xf]
      %v212 = vld [vmem:[%s1 + $0x34] sm:$0xf]
      %v213 = vld [vmem:[%s1 + $0x38] sm:$0xf]
      %v214 = vld [vmem:[%s1 + $0x3c] sm:$0xf]
      %v215 = vld [vmem:[%s2] sm:$0x1]
      %v216 = vlaneseq
      %v217 = vshrl.u32 %v216, 7
      %v218 = vsub.s32 0, %v217
      %v219 = vrot.slane %v215, %v218
      %v236 = vunpack.c.l.b16 %v199
      %v237 = vunpack.c.l.b16 %v200
      %v238 = vunpack.c.l.b16 %v201
      %v239 = vunpack.c.l.b16 %v202
      %v240 = vunpack.c.l.b16 %v203
      %v241 = vunpack.c.l.b16 %v204
      %v242 = vunpack.c.l.b16 %v205
      %v243 = vunpack.c.l.b16 %v206
      %v244 = vunpack.c.l.b16 %v207
      %v245 = vunpack.c.l.b16 %v208
      %v246 = vunpack.c.l.b16 %v209
      %v247 = vunpack.c.l.b16 %v210
      %v248 = vunpack.c.l.b16 %v211
      %v249 = vunpack.c.l.b16 %v212
      %v250 = vunpack.c.l.b16 %v213
      %v251 = vunpack.c.l.b16 %v214
      %v252 = vpack.c.b16 %v237, %v236
      %v253 = vpack.c.b16 %v239, %v238
      %v254 = vpack.c.b16 %v241, %v240
      %v255 = vpack.c.b16 %v243, %v242
      %v256 = vpack.c.b16 %v245, %v244
      %v257 = vpack.c.b16 %v247, %v246
      %v258 = vpack.c.b16 %v249, %v248
      %v259 = vpack.c.b16 %v251, %v250
      %268 = vmatprep.subr.bf16.mxu0 0
      %269 = vmatpush1.bf16.msra.mxu0 %v259
      %270 = vmatprep.subr.bf16.mxu0 0
      %271 = vmatpush1.bf16.msra.mxu0 %v258
      %272 = vmatprep.subr.bf16.mxu0 0
      %273 = vmatpush1.bf16.msra.mxu0 %v257
      %274 = vmatprep.subr.bf16.mxu0 0
      %275 = vmatpush1.bf16.msra.mxu0 %v256
      %276 = vmatprep.subr.bf16.mxu0 0
      %277 = vmatpush1.bf16.msra.mxu0 %v255
      %278 = vmatprep.subr.bf16.mxu0 0
      %279 = vmatpush1.bf16.msra.mxu0 %v254
      %280 = vmatprep.subr.bf16.mxu0 0
      %281 = vmatpush1.bf16.msra.mxu0 %v253
      %282 = vmatprep.subr.bf16.mxu0 0
      %283 = vmatpush1.bf16.msra.mxu0 %v252
      %284 = vmatprep.subr.bf16.mxu0 0
      %285 = vmatpush2.bf16.msra.mxu0 0
      %286 = vmatprep.subr.bf16.mxu0 0
      %287 = vmatpush2.bf16.msra.mxu0 0
      %288 = vmatprep.subr.bf16.mxu0 0
      %289 = vmatpush2.bf16.msra.mxu0 0
      %290 = vmatprep.subr.bf16.mxu0 0
      %291 = vmatpush2.bf16.msra.mxu0 0
      %292 = vmatprep.subr.bf16.mxu0 0
      %293 = vmatpush2.bf16.msra.mxu0 0
      %294 = vmatprep.subr.bf16.mxu0 0
      %295 = vmatpush2.bf16.msra.mxu0 0
      %296 = vmatprep.subr.bf16.mxu0 0
      %297 = vmatpush2.bf16.msra.mxu0 0
      %298 = vmatprep.subr.bf16.mxu0 0
      %299 = vmatpush2.bf16.msra.mxu0 0
      %300 = vmatprep.mubr.bf16.mxu0 0
      %301 = vmatmul.mubr.bf16.gmra.mxu0 %v191
      %v302 = vpop.f32.mrf.mxu0
      %v303 = vadd.f32 %v219, %v302
      %v304 = vpop.f32.mrf.mxu0
      %v305 = vpop.f32.mrf.mxu0
      %v306 = vadd.f32 %v219, %v305
      %v307 = vpop.f32.mrf.mxu0
      %308 = vmatprep.mubr.bf16.mxu0 0
      %309 = vmatmul.mubr.bf16.gmra.mxu0 %v192
      %v310 = vpop.f32.mrf.mxu0
      %v311 = vadd.f32 %v219, %v310
      %v312 = vpop.f32.mrf.mxu0
      %v313 = vpop.f32.mrf.mxu0
      %v314 = vadd.f32 %v219, %v313
      %v315 = vpop.f32.mrf.mxu0
      %316 = vmatprep.mubr.bf16.mxu0 0
      %317 = vmatmul.mubr.bf16.gmra.mxu0 %v193
      %v318 = vpop.f32.mrf.mxu0
      %v319 = vadd.f32 %v219, %v318
      %v320 = vpop.f32.mrf.mxu0
      %v321 = vpop.f32.mrf.mxu0
      %v322 = vadd.f32 %v219, %v321
      %v323 = vpop.f32.mrf.mxu0
      %324 = vmatprep.mubr.bf16.mxu0 0
      %325 = vmatmul.mubr.bf16.gmra.mxu0 %v194
      %v326 = vpop.f32.mrf.mxu0
      %v327 = vadd.f32 %v219, %v326
      %v328 = vpop.f32.mrf.mxu0
      %v329 = vpop.f32.mrf.mxu0
      %v330 = vadd.f32 %v219, %v329
      %v331 = vpop.f32.mrf.mxu0
      %332 = vmatprep.mubr.bf16.mxu0 0
      %333 = vmatmul.mubr.bf16.gmra.mxu0 %v195
      %v334 = vpop.f32.mrf.mxu0
      %v335 = vadd.f32 %v219, %v334
      %v336 = vpop.f32.mrf.mxu0
      %v337 = vpop.f32.mrf.mxu0
      %v338 = vadd.f32 %v219, %v337
      %v339 = vpop.f32.mrf.mxu0
      %340 = vmatprep.mubr.bf16.mxu0 0
      %341 = vmatmul.mubr.bf16.gmra.mxu0 %v196
      %v342 = vpop.f32.mrf.mxu0
      %v343 = vadd.f32 %v219, %v342
      %v344 = vpop.f32.mrf.mxu0
      %v345 = vpop.f32.mrf.mxu0
      %v346 = vadd.f32 %v219, %v345
      %v347 = vpop.f32.mrf.mxu0
      %348 = vmatprep.mubr.bf16.mxu0 0
      %349 = vmatmul.mubr.bf16.gmra.mxu0 %v197
      %v350 = vpop.f32.mrf.mxu0
      %v351 = vadd.f32 %v219, %v350
      %v352 = vpop.f32.mrf.mxu0
      %v353 = vpop.f32.mrf.mxu0
      %v354 = vadd.f32 %v219, %v353
      %v355 = vpop.f32.mrf.mxu0
      %356 = vmatprep.mubr.bf16.mxu0 0
      %357 = vmatmul.mubr.bf16.gmra.mxu0 %v198
      %v358 = vpop.f32.mrf.mxu0
      %v359 = vadd.f32 %v219, %v358
      %v360 = vpop.f32.mrf.mxu0
      %v361 = vpop.f32.mrf.mxu0
      %v362 = vadd.f32 %v219, %v361
      %v363 = vpop.f32.mrf.mxu0
      %364 = vdwg.mxu0
      %v365 = vmax.f32 %v303, 0.0
      %v366 = vmax.f32 %v306, 0.0
      %v367 = vmax.f32 %v311, 0.0
      %v368 = vmax.f32 %v314, 0.0
      %v369 = vmax.f32 %v319, 0.0
      %v370 = vmax.f32 %v322, 0.0
      %v371 = vmax.f32 %v327, 0.0
      %v372 = vmax.f32 %v330, 0.0
      %v373 = vmax.f32 %v335, 0.0
      %v374 = vmax.f32 %v338, 0.0
      %v375 = vmax.f32 %v343, 0.0
      %v376 = vmax.f32 %v346, 0.0
      %v377 = vmax.f32 %v351, 0.0
      %v378 = vmax.f32 %v354, 0.0
      %v379 = vmax.f32 %v359, 0.0
      %v380 = vmax.f32 %v362, 0.0
      %v381 = vpack.c.bf16 %v366, %v365
      %v382 = vpack.c.bf16 %v368, %v367
      %v383 = vpack.c.bf16 %v370, %v369
      %v384 = vpack.c.bf16 %v372, %v371
      %v385 = vpack.c.bf16 %v374, %v373
      %v386 = vpack.c.bf16 %v376, %v375
      %v387 = vpack.c.bf16 %v378, %v377
      %v388 = vpack.c.bf16 %v380, %v379
      %s389 = scalar_lea.vmem %s1, 64
      %v390 = vld [vmem:[%s389] sm:$0xf]
      %v391 = vld [vmem:[%s389 + $0x4] sm:$0xf]
      %v392 = vld [vmem:[%s389 + $0x8] sm:$0xf]
      %v393 = vld [vmem:[%s389 + $0xc] sm:$0xf]
      %v394 = vld [vmem:[%s389 + $0x10] sm:$0xf]
      %v395 = vld [vmem:[%s389 + $0x14] sm:$0xf]
      %v396 = vld [vmem:[%s389 + $0x18] sm:$0xf]
      %v397 = vld [vmem:[%s389 + $0x1c] sm:$0xf]
      %v398 = vld [vmem:[%s389 + $0x20] sm:$0xf]
      %v399 = vld [vmem:[%s389 + $0x24] sm:$0xf]
      %v400 = vld [vmem:[%s389 + $0x28] sm:$0xf]
      %v401 = vld [vmem:[%s389 + $0x2c] sm:$0xf]
      %v402 = vld [vmem:[%s389 + $0x30] sm:$0xf]
      %v403 = vld [vmem:[%s389 + $0x34] sm:$0xf]
      %v404 = vld [vmem:[%s389 + $0x38] sm:$0xf]
      %v405 = vld [vmem:[%s389 + $0x3c] sm:$0xf]
      %v406 = vld [vmem:[%s2 + $0x1] sm:$0x1]
      %v407 = vlaneseq
      %v408 = vshrl.u32 %v407, 7
      %v409 = vsub.s32 0, %v408
      %v410 = vrot.slane %v406, %v409
      %v427 = vunpack.c.l.b16 %v390
      %v428 = vunpack.c.l.b16 %v391
      %v429 = vunpack.c.l.b16 %v392
      %v430 = vunpack.c.l.b16 %v393
      %v431 = vunpack.c.l.b16 %v394
      %v432 = vunpack.c.l.b16 %v395
      %v433 = vunpack.c.l.b16 %v396
      %v434 = vunpack.c.l.b16 %v397
      %v435 = vunpack.c.l.b16 %v398
      %v436 = vunpack.c.l.b16 %v399
      %v437 = vunpack.c.l.b16 %v400
      %v438 = vunpack.c.l.b16 %v401
      %v439 = vunpack.c.l.b16 %v402
      %v440 = vunpack.c.l.b16 %v403
      %v441 = vunpack.c.l.b16 %v404
      %v442 = vunpack.c.l.b16 %v405
      %v443 = vpack.c.b16 %v428, %v427
      %v444 = vpack.c.b16 %v430, %v429
      %v445 = vpack.c.b16 %v432, %v431
      %v446 = vpack.c.b16 %v434, %v433
      %v447 = vpack.c.b16 %v436, %v435
      %v448 = vpack.c.b16 %v438, %v437
      %v449 = vpack.c.b16 %v440, %v439
      %v450 = vpack.c.b16 %v442, %v441
      %459 = vmatprep.subr.bf16.mxu0 0
      %460 = vmatpush1.bf16.msra.mxu0 %v450
      %461 = vmatprep.subr.bf16.mxu0 0
      %462 = vmatpush1.bf16.msra.mxu0 %v449
      %463 = vmatprep.subr.bf16.mxu0 0
      %464 = vmatpush1.bf16.msra.mxu0 %v448
      %465 = vmatprep.subr.bf16.mxu0 0
      %466 = vmatpush1.bf16.msra.mxu0 %v447
      %467 = vmatprep.subr.bf16.mxu0 0
      %468 = vmatpush1.bf16.msra.mxu0 %v446
      %469 = vmatprep.subr.bf16.mxu0 0
      %470 = vmatpush1.bf16.msra.mxu0 %v445
      %471 = vmatprep.subr.bf16.mxu0 0
      %472 = vmatpush1.bf16.msra.mxu0 %v444
      %473 = vmatprep.subr.bf16.mxu0 0
      %474 = vmatpush1.bf16.msra.mxu0 %v443
      %475 = vmatprep.subr.bf16.mxu0 0
      %476 = vmatpush2.bf16.msra.mxu0 0
      %477 = vmatprep.subr.bf16.mxu0 0
      %478 = vmatpush2.bf16.msra.mxu0 0
      %479 = vmatprep.subr.bf16.mxu0 0
      %480 = vmatpush2.bf16.msra.mxu0 0
      %481 = vmatprep.subr.bf16.mxu0 0
      %482 = vmatpush2.bf16.msra.mxu0 0
      %483 = vmatprep.subr.bf16.mxu0 0
      %484 = vmatpush2.bf16.msra.mxu0 0
      %485 = vmatprep.subr.bf16.mxu0 0
      %486 = vmatpush2.bf16.msra.mxu0 0
      %487 = vmatprep.subr.bf16.mxu0 0
      %488 = vmatpush2.bf16.msra.mxu0 0
      %489 = vmatprep.subr.bf16.mxu0 0
      %490 = vmatpush2.bf16.msra.mxu0 0
      %491 = vmatprep.mubr.bf16.mxu0 0
      %492 = vmatmul.mubr.bf16.gmra.mxu0 %v381
      %v493 = vpop.f32.mrf.mxu0
      %v494 = vadd.f32 %v410, %v493
      %v495 = vpop.f32.mrf.mxu0
      %v496 = vpop.f32.mrf.mxu0
      %v497 = vadd.f32 %v410, %v496
      %v498 = vpop.f32.mrf.mxu0
      %499 = vmatprep.mubr.bf16.mxu0 0
      %500 = vmatmul.mubr.bf16.gmra.mxu0 %v382
      %v501 = vpop.f32.mrf.mxu0
      %v502 = vadd.f32 %v410, %v501
      %v503 = vpop.f32.mrf.mxu0
      %v504 = vpop.f32.mrf.mxu0
      %v505 = vadd.f32 %v410, %v504
      %v506 = vpop.f32.mrf.mxu0
      %507 = vmatprep.mubr.bf16.mxu0 0
      %508 = vmatmul.mubr.bf16.gmra.mxu0 %v383
      %v509 = vpop.f32.mrf.mxu0
      %v510 = vadd.f32 %v410, %v509
      %v511 = vpop.f32.mrf.mxu0
      %v512 = vpop.f32.mrf.mxu0
      %v513 = vadd.f32 %v410, %v512
      %v514 = vpop.f32.mrf.mxu0
      %515 = vmatprep.mubr.bf16.mxu0 0
      %516 = vmatmul.mubr.bf16.gmra.mxu0 %v384
      %v517 = vpop.f32.mrf.mxu0
      %v518 = vadd.f32 %v410, %v517
      %v519 = vpop.f32.mrf.mxu0
      %v520 = vpop.f32.mrf.mxu0
      %v521 = vadd.f32 %v410, %v520
      %v522 = vpop.f32.mrf.mxu0
      %523 = vmatprep.mubr.bf16.mxu0 0
      %524 = vmatmul.mubr.bf16.gmra.mxu0 %v385
      %v525 = vpop.f32.mrf.mxu0
      %v526 = vadd.f32 %v410, %v525
      %v527 = vpop.f32.mrf.mxu0
      %v528 = vpop.f32.mrf.mxu0
      %v529 = vadd.f32 %v410, %v528
      %v530 = vpop.f32.mrf.mxu0
      %531 = vmatprep.mubr.bf16.mxu0 0
      %532 = vmatmul.mubr.bf16.gmra.mxu0 %v386
      %v533 = vpop.f32.mrf.mxu0
      %v534 = vadd.f32 %v410, %v533
      %v535 = vpop.f32.mrf.mxu0
      %v536 = vpop.f32.mrf.mxu0
      %v537 = vadd.f32 %v410, %v536
      %v538 = vpop.f32.mrf.mxu0
      %539 = vmatprep.mubr.bf16.mxu0 0
      %540 = vmatmul.mubr.bf16.gmra.mxu0 %v387
      %v541 = vpop.f32.mrf.mxu0
      %v542 = vadd.f32 %v410, %v541
      %v543 = vpop.f32.mrf.mxu0
      %v544 = vpop.f32.mrf.mxu0
      %v545 = vadd.f32 %v410, %v544
      %v546 = vpop.f32.mrf.mxu0
      %547 = vmatprep.mubr.bf16.mxu0 0
      %548 = vmatmul.mubr.bf16.gmra.mxu0 %v388
      %v549 = vpop.f32.mrf.mxu0
      %v550 = vadd.f32 %v410, %v549
      %v551 = vpop.f32.mrf.mxu0
      %v552 = vpop.f32.mrf.mxu0
      %v553 = vadd.f32 %v410, %v552
      %v554 = vpop.f32.mrf.mxu0
      %555 = vdwg.mxu0
      %v556 = vmax.f32 %v494, 0.0
      %v557 = vmax.f32 %v497, 0.0
      %v558 = vmax.f32 %v502, 0.0
      %v559 = vmax.f32 %v505, 0.0
      %v560 = vmax.f32 %v510, 0.0
      %v561 = vmax.f32 %v513, 0.0
      %v562 = vmax.f32 %v518, 0.0
      %v563 = vmax.f32 %v521, 0.0
      %v564 = vmax.f32 %v526, 0.0
      %v565 = vmax.f32 %v529, 0.0
      %v566 = vmax.f32 %v534, 0.0
      %v567 = vmax.f32 %v537, 0.0
      %v568 = vmax.f32 %v542, 0.0
      %v569 = vmax.f32 %v545, 0.0
      %v570 = vmax.f32 %v550, 0.0
      %v571 = vmax.f32 %v553, 0.0
      %v572 = vpack.c.bf16 %v557, %v556
      %v573 = vpack.c.bf16 %v559, %v558
      %v574 = vpack.c.bf16 %v561, %v560
      %v575 = vpack.c.bf16 %v563, %v562
      %v576 = vpack.c.bf16 %v565, %v564
      %v577 = vpack.c.bf16 %v567, %v566
      %v578 = vpack.c.bf16 %v569, %v568
      %v579 = vpack.c.bf16 %v571, %v570
      %s580 = scalar_lea.vmem %s1, 128
      %v581 = vld [vmem:[%s580] sm:$0xf]
      %v582 = vld [vmem:[%s580 + $0x4] sm:$0xf]
      %v583 = vld [vmem:[%s580 + $0x8] sm:$0xf]
      %v584 = vld [vmem:[%s580 + $0xc] sm:$0xf]
      %v585 = vld [vmem:[%s580 + $0x10] sm:$0xf]
      %v586 = vld [vmem:[%s580 + $0x14] sm:$0xf]
      %v587 = vld [vmem:[%s580 + $0x18] sm:$0xf]
      %v588 = vld [vmem:[%s580 + $0x1c] sm:$0xf]
      %v589 = vld [vmem:[%s580 + $0x20] sm:$0xf]
      %v590 = vld [vmem:[%s580 + $0x24] sm:$0xf]
      %v591 = vld [vmem:[%s580 + $0x28] sm:$0xf]
      %v592 = vld [vmem:[%s580 + $0x2c] sm:$0xf]
      %v593 = vld [vmem:[%s580 + $0x30] sm:$0xf]
      %v594 = vld [vmem:[%s580 + $0x34] sm:$0xf]
      %v595 = vld [vmem:[%s580 + $0x38] sm:$0xf]
      %v596 = vld [vmem:[%s580 + $0x3c] sm:$0xf]
      %v597 = vld [vmem:[%s2 + $0x2] sm:$0x1]
      %v598 = vlaneseq
      %v599 = vshrl.u32 %v598, 7
      %v600 = vsub.s32 0, %v599
      %v601 = vrot.slane %v597, %v600
      %v618 = vunpack.c.l.b16 %v581
      %v619 = vunpack.c.l.b16 %v582
      %v620 = vunpack.c.l.b16 %v583
      %v621 = vunpack.c.l.b16 %v584
      %v622 = vunpack.c.l.b16 %v585
      %v623 = vunpack.c.l.b16 %v586
      %v624 = vunpack.c.l.b16 %v587
      %v625 = vunpack.c.l.b16 %v588
      %v626 = vunpack.c.l.b16 %v589
      %v627 = vunpack.c.l.b16 %v590
      %v628 = vunpack.c.l.b16 %v591
      %v629 = vunpack.c.l.b16 %v592
      %v630 = vunpack.c.l.b16 %v593
      %v631 = vunpack.c.l.b16 %v594
      %v632 = vunpack.c.l.b16 %v595
      %v633 = vunpack.c.l.b16 %v596
      %v634 = vpack.c.b16 %v619, %v618
      %v635 = vpack.c.b16 %v621, %v620
      %v636 = vpack.c.b16 %v623, %v622
      %v637 = vpack.c.b16 %v625, %v624
      %v638 = vpack.c.b16 %v627, %v626
      %v639 = vpack.c.b16 %v629, %v628
      %v640 = vpack.c.b16 %v631, %v630
      %v641 = vpack.c.b16 %v633, %v632
      %650 = vmatprep.subr.bf16.mxu0 0
      %651 = vmatpush1.bf16.msra.mxu0 %v641
      %652 = vmatprep.subr.bf16.mxu0 0
      %653 = vmatpush1.bf16.msra.mxu0 %v640
      %654 = vmatprep.subr.bf16.mxu0 0
      %655 = vmatpush1.bf16.msra.mxu0 %v639
      %656 = vmatprep.subr.bf16.mxu0 0
      %657 = vmatpush1.bf16.msra.mxu0 %v638
      %658 = vmatprep.subr.bf16.mxu0 0
      %659 = vmatpush1.bf16.msra.mxu0 %v637
      %660 = vmatprep.subr.bf16.mxu0 0
      %661 = vmatpush1.bf16.msra.mxu0 %v636
      %662 = vmatprep.subr.bf16.mxu0 0
      %663 = vmatpush1.bf16.msra.mxu0 %v635
      %664 = vmatprep.subr.bf16.mxu0 0
      %665 = vmatpush1.bf16.msra.mxu0 %v634
      %666 = vmatprep.subr.bf16.mxu0 0
      %667 = vmatpush2.bf16.msra.mxu0 0
      %668 = vmatprep.subr.bf16.mxu0 0
      %669 = vmatpush2.bf16.msra.mxu0 0
      %670 = vmatprep.subr.bf16.mxu0 0
      %671 = vmatpush2.bf16.msra.mxu0 0
      %672 = vmatprep.subr.bf16.mxu0 0
      %673 = vmatpush2.bf16.msra.mxu0 0
      %674 = vmatprep.subr.bf16.mxu0 0
      %675 = vmatpush2.bf16.msra.mxu0 0
      %676 = vmatprep.subr.bf16.mxu0 0
      %677 = vmatpush2.bf16.msra.mxu0 0
      %678 = vmatprep.subr.bf16.mxu0 0
      %679 = vmatpush2.bf16.msra.mxu0 0
      %680 = vmatprep.subr.bf16.mxu0 0
      %681 = vmatpush2.bf16.msra.mxu0 0
      %682 = vmatprep.mubr.bf16.mxu0 0
      %683 = vmatmul.mubr.bf16.gmra.mxu0 %v572
      %v684 = vpop.f32.mrf.mxu0
      %v685 = vadd.f32 %v601, %v684
      %v686 = vpop.f32.mrf.mxu0
      %v687 = vpop.f32.mrf.mxu0
      %v688 = vadd.f32 %v601, %v687
      %v689 = vpop.f32.mrf.mxu0
      %690 = vmatprep.mubr.bf16.mxu0 0
      %691 = vmatmul.mubr.bf16.gmra.mxu0 %v573
      %v692 = vpop.f32.mrf.mxu0
      %v693 = vadd.f32 %v601, %v692
      %v694 = vpop.f32.mrf.mxu0
      %v695 = vpop.f32.mrf.mxu0
      %v696 = vadd.f32 %v601, %v695
      %v697 = vpop.f32.mrf.mxu0
      %698 = vmatprep.mubr.bf16.mxu0 0
      %699 = vmatmul.mubr.bf16.gmra.mxu0 %v574
      %v700 = vpop.f32.mrf.mxu0
      %v701 = vadd.f32 %v601, %v700
      %v702 = vpop.f32.mrf.mxu0
      %v703 = vpop.f32.mrf.mxu0
      %v704 = vadd.f32 %v601, %v703
      %v705 = vpop.f32.mrf.mxu0
      %706 = vmatprep.mubr.bf16.mxu0 0
      %707 = vmatmul.mubr.bf16.gmra.mxu0 %v575
      %v708 = vpop.f32.mrf.mxu0
      %v709 = vadd.f32 %v601, %v708
      %v710 = vpop.f32.mrf.mxu0
      %v711 = vpop.f32.mrf.mxu0
      %v712 = vadd.f32 %v601, %v711
      %v713 = vpop.f32.mrf.mxu0
      %714 = vmatprep.mubr.bf16.mxu0 0
      %715 = vmatmul.mubr.bf16.gmra.mxu0 %v576
      %v716 = vpop.f32.mrf.mxu0
      %v717 = vadd.f32 %v601, %v716
      %v718 = vpop.f32.mrf.mxu0
      %v719 = vpop.f32.mrf.mxu0
      %v720 = vadd.f32 %v601, %v719
      %v721 = vpop.f32.mrf.mxu0
      %722 = vmatprep.mubr.bf16.mxu0 0
      %723 = vmatmul.mubr.bf16.gmra.mxu0 %v577
      %v724 = vpop.f32.mrf.mxu0
      %v725 = vadd.f32 %v601, %v724
      %v726 = vpop.f32.mrf.mxu0
      %v727 = vpop.f32.mrf.mxu0
      %v728 = vadd.f32 %v601, %v727
      %v729 = vpop.f32.mrf.mxu0
      %730 = vmatprep.mubr.bf16.mxu0 0
      %731 = vmatmul.mubr.bf16.gmra.mxu0 %v578
      %v732 = vpop.f32.mrf.mxu0
      %v733 = vadd.f32 %v601, %v732
      %v734 = vpop.f32.mrf.mxu0
      %v735 = vpop.f32.mrf.mxu0
      %v736 = vadd.f32 %v601, %v735
      %v737 = vpop.f32.mrf.mxu0
      %738 = vmatprep.mubr.bf16.mxu0 0
      %739 = vmatmul.mubr.bf16.gmra.mxu0 %v579
      %v740 = vpop.f32.mrf.mxu0
      %v741 = vadd.f32 %v601, %v740
      %v742 = vpop.f32.mrf.mxu0
      %v743 = vpop.f32.mrf.mxu0
      %v744 = vadd.f32 %v601, %v743
      %v745 = vpop.f32.mrf.mxu0
      %746 = vdwg.mxu0
      %v747 = vmax.f32 %v685, 0.0
      %v748 = vmax.f32 %v688, 0.0
      %v749 = vmax.f32 %v693, 0.0
      %v750 = vmax.f32 %v696, 0.0
      %v751 = vmax.f32 %v701, 0.0
      %v752 = vmax.f32 %v704, 0.0
      %v753 = vmax.f32 %v709, 0.0
      %v754 = vmax.f32 %v712, 0.0
      %v755 = vmax.f32 %v717, 0.0
      %v756 = vmax.f32 %v720, 0.0
      %v757 = vmax.f32 %v725, 0.0
      %v758 = vmax.f32 %v728, 0.0
      %v759 = vmax.f32 %v733, 0.0
      %v760 = vmax.f32 %v736, 0.0
      %v761 = vmax.f32 %v741, 0.0
      %v762 = vmax.f32 %v744, 0.0
      %v763 = vld [vmem:[%s2 + $0x3] sm:$0x1]
      %v764 = vlaneseq
      %v765 = vshrl.u32 %v764, 7
      %v766 = vsub.s32 0, %v765
      %v767 = vrot.slane %v763, %v766
      %v768 = vmul.f32 %v747, %v767
      %v769 = vmul.f32 %v748, %v767
      %v770 = vmul.f32 %v749, %v767
      %v771 = vmul.f32 %v750, %v767
      %v772 = vmul.f32 %v751, %v767
      %v773 = vmul.f32 %v752, %v767
      %v774 = vmul.f32 %v753, %v767
      %v775 = vmul.f32 %v754, %v767
      %v776 = vmul.f32 %v755, %v767
      %v777 = vmul.f32 %v756, %v767
      %v778 = vmul.f32 %v757, %v767
      %v779 = vmul.f32 %v758, %v767
      %v780 = vmul.f32 %v759, %v767
      %v781 = vmul.f32 %v760, %v767
      %v782 = vmul.f32 %v761, %v767
      %v783 = vmul.f32 %v762, %v767
      %v784 = vld [vmem:[%s2 + $0x4] sm:$0x1]
      %v785 = vlaneseq
      %v786 = vshrl.u32 %v785, 7
      %v787 = vsub.s32 0, %v786
      %v788 = vrot.slane %v784, %v787
      %v789 = vadd.f32 %v768, %v788
      %v790 = vadd.f32 %v769, %v788
      %v791 = vadd.f32 %v770, %v788
      %v792 = vadd.f32 %v771, %v788
      %v793 = vadd.f32 %v772, %v788
      %v794 = vadd.f32 %v773, %v788
      %v795 = vadd.f32 %v774, %v788
      %v796 = vadd.f32 %v775, %v788
      %v797 = vadd.f32 %v776, %v788
      %v798 = vadd.f32 %v777, %v788
      %v799 = vadd.f32 %v778, %v788
      %v800 = vadd.f32 %v779, %v788
      %v801 = vadd.f32 %v780, %v788
      %v802 = vadd.f32 %v781, %v788
      %v803 = vadd.f32 %v782, %v788
      %v804 = vadd.f32 %v783, %v788
      %v805 = vadd.f32 %v365, %v789
      %v806 = vadd.f32 %v366, %v790
      %v807 = vadd.f32 %v367, %v791
      %v808 = vadd.f32 %v368, %v792
      %v809 = vadd.f32 %v369, %v793
      %v810 = vadd.f32 %v370, %v794
      %v811 = vadd.f32 %v371, %v795
      %v812 = vadd.f32 %v372, %v796
      %v813 = vadd.f32 %v373, %v797
      %v814 = vadd.f32 %v374, %v798
      %v815 = vadd.f32 %v375, %v799
      %v816 = vadd.f32 %v376, %v800
      %v817 = vadd.f32 %v377, %v801
      %v818 = vadd.f32 %v378, %v802
      %v819 = vadd.f32 %v379, %v803
      %v820 = vadd.f32 %v380, %v804
      %v821 = vpack.c.bf16 %v806, %v805
      %v822 = vpack.c.bf16 %v808, %v807
      %v823 = vpack.c.bf16 %v810, %v809
      %v824 = vpack.c.bf16 %v812, %v811
      %v825 = vpack.c.bf16 %v814, %v813
      %v826 = vpack.c.bf16 %v816, %v815
      %v827 = vpack.c.bf16 %v818, %v817
      %v828 = vpack.c.bf16 %v820, %v819
      %s829 = scalar_lea.vmem %s1, 192
      %v830 = vld [vmem:[%s829] sm:$0xf]
      %v831 = vld [vmem:[%s829 + $0x4] sm:$0xf]
      %v832 = vld [vmem:[%s829 + $0x8] sm:$0xf]
      %v833 = vld [vmem:[%s829 + $0xc] sm:$0xf]
      %v834 = vld [vmem:[%s829 + $0x10] sm:$0xf]
      %v835 = vld [vmem:[%s829 + $0x14] sm:$0xf]
      %v836 = vld [vmem:[%s829 + $0x18] sm:$0xf]
      %v837 = vld [vmem:[%s829 + $0x1c] sm:$0xf]
      %v838 = vld [vmem:[%s829 + $0x20] sm:$0xf]
      %v839 = vld [vmem:[%s829 + $0x24] sm:$0xf]
      %v840 = vld [vmem:[%s829 + $0x28] sm:$0xf]
      %v841 = vld [vmem:[%s829 + $0x2c] sm:$0xf]
      %v842 = vld [vmem:[%s829 + $0x30] sm:$0xf]
      %v843 = vld [vmem:[%s829 + $0x34] sm:$0xf]
      %v844 = vld [vmem:[%s829 + $0x38] sm:$0xf]
      %v845 = vld [vmem:[%s829 + $0x3c] sm:$0xf]
      %v846 = vld [vmem:[%s2 + $0x5] sm:$0x1]
      %v847 = vlaneseq
      %v848 = vshrl.u32 %v847, 7
      %v849 = vsub.s32 0, %v848
      %v850 = vrot.slane %v846, %v849
      %v867 = vunpack.c.l.b16 %v830
      %v868 = vunpack.c.l.b16 %v831
      %v869 = vunpack.c.l.b16 %v832
      %v870 = vunpack.c.l.b16 %v833
      %v871 = vunpack.c.l.b16 %v834
      %v872 = vunpack.c.l.b16 %v835
      %v873 = vunpack.c.l.b16 %v836
      %v874 = vunpack.c.l.b16 %v837
      %v875 = vunpack.c.l.b16 %v838
      %v876 = vunpack.c.l.b16 %v839
      %v877 = vunpack.c.l.b16 %v840
      %v878 = vunpack.c.l.b16 %v841
      %v879 = vunpack.c.l.b16 %v842
      %v880 = vunpack.c.l.b16 %v843
      %v881 = vunpack.c.l.b16 %v844
      %v882 = vunpack.c.l.b16 %v845
      %v883 = vpack.c.b16 %v868, %v867
      %v884 = vpack.c.b16 %v870, %v869
      %v885 = vpack.c.b16 %v872, %v871
      %v886 = vpack.c.b16 %v874, %v873
      %v887 = vpack.c.b16 %v876, %v875
      %v888 = vpack.c.b16 %v878, %v877
      %v889 = vpack.c.b16 %v880, %v879
      %v890 = vpack.c.b16 %v882, %v881
      %899 = vmatprep.subr.bf16.mxu0 0
      %900 = vmatpush1.bf16.msra.mxu0 %v890
      %901 = vmatprep.subr.bf16.mxu0 0
      %902 = vmatpush1.bf16.msra.mxu0 %v889
      %903 = vmatprep.subr.bf16.mxu0 0
      %904 = vmatpush1.bf16.msra.mxu0 %v888
      %905 = vmatprep.subr.bf16.mxu0 0
      %906 = vmatpush1.bf16.msra.mxu0 %v887
      %907 = vmatprep.subr.bf16.mxu0 0
      %908 = vmatpush1.bf16.msra.mxu0 %v886
      %909 = vmatprep.subr.bf16.mxu0 0
      %910 = vmatpush1.bf16.msra.mxu0 %v885
      %911 = vmatprep.subr.bf16.mxu0 0
      %912 = vmatpush1.bf16.msra.mxu0 %v884
      %913 = vmatprep.subr.bf16.mxu0 0
      %914 = vmatpush1.bf16.msra.mxu0 %v883
      %915 = vmatprep.subr.bf16.mxu0 0
      %916 = vmatpush2.bf16.msra.mxu0 0
      %917 = vmatprep.subr.bf16.mxu0 0
      %918 = vmatpush2.bf16.msra.mxu0 0
      %919 = vmatprep.subr.bf16.mxu0 0
      %920 = vmatpush2.bf16.msra.mxu0 0
      %921 = vmatprep.subr.bf16.mxu0 0
      %922 = vmatpush2.bf16.msra.mxu0 0
      %923 = vmatprep.subr.bf16.mxu0 0
      %924 = vmatpush2.bf16.msra.mxu0 0
      %925 = vmatprep.subr.bf16.mxu0 0
      %926 = vmatpush2.bf16.msra.mxu0 0
      %927 = vmatprep.subr.bf16.mxu0 0
      %928 = vmatpush2.bf16.msra.mxu0 0
      %929 = vmatprep.subr.bf16.mxu0 0
      %930 = vmatpush2.bf16.msra.mxu0 0
      %931 = vmatprep.mubr.bf16.mxu0 0
      %932 = vmatmul.mubr.bf16.gmra.mxu0 %v821
      %v933 = vpop.f32.mrf.mxu0
      %v934 = vadd.f32 %v850, %v933
      %v935 = vpop.f32.mrf.mxu0
      %v936 = vpop.f32.mrf.mxu0
      %v937 = vadd.f32 %v850, %v936
      %v938 = vpop.f32.mrf.mxu0
      %939 = vmatprep.mubr.bf16.mxu0 0
      %940 = vmatmul.mubr.bf16.gmra.mxu0 %v822
      %v941 = vpop.f32.mrf.mxu0
      %v942 = vadd.f32 %v850, %v941
      %v943 = vpop.f32.mrf.mxu0
      %v944 = vpop.f32.mrf.mxu0
      %v945 = vadd.f32 %v850, %v944
      %v946 = vpop.f32.mrf.mxu0
      %947 = vmatprep.mubr.bf16.mxu0 0
      %948 = vmatmul.mubr.bf16.gmra.mxu0 %v823
      %v949 = vpop.f32.mrf.mxu0
      %v950 = vadd.f32 %v850, %v949
      %v951 = vpop.f32.mrf.mxu0
      %v952 = vpop.f32.mrf.mxu0
      %v953 = vadd.f32 %v850, %v952
      %v954 = vpop.f32.mrf.mxu0
      %955 = vmatprep.mubr.bf16.mxu0 0
      %956 = vmatmul.mubr.bf16.gmra.mxu0 %v824
      %v957 = vpop.f32.mrf.mxu0
      %v958 = vadd.f32 %v850, %v957
      %v959 = vpop.f32.mrf.mxu0
      %v960 = vpop.f32.mrf.mxu0
      %v961 = vadd.f32 %v850, %v960
      %v962 = vpop.f32.mrf.mxu0
      %963 = vmatprep.mubr.bf16.mxu0 0
      %964 = vmatmul.mubr.bf16.gmra.mxu0 %v825
      %v965 = vpop.f32.mrf.mxu0
      %v966 = vadd.f32 %v850, %v965
      %v967 = vpop.f32.mrf.mxu0
      %v968 = vpop.f32.mrf.mxu0
      %v969 = vadd.f32 %v850, %v968
      %v970 = vpop.f32.mrf.mxu0
      %971 = vmatprep.mubr.bf16.mxu0 0
      %972 = vmatmul.mubr.bf16.gmra.mxu0 %v826
      %v973 = vpop.f32.mrf.mxu0
      %v974 = vadd.f32 %v850, %v973
      %v975 = vpop.f32.mrf.mxu0
      %v976 = vpop.f32.mrf.mxu0
      %v977 = vadd.f32 %v850, %v976
      %v978 = vpop.f32.mrf.mxu0
      %979 = vmatprep.mubr.bf16.mxu0 0
      %980 = vmatmul.mubr.bf16.gmra.mxu0 %v827
      %v981 = vpop.f32.mrf.mxu0
      %v982 = vadd.f32 %v850, %v981
      %v983 = vpop.f32.mrf.mxu0
      %v984 = vpop.f32.mrf.mxu0
      %v985 = vadd.f32 %v850, %v984
      %v986 = vpop.f32.mrf.mxu0
      %987 = vmatprep.mubr.bf16.mxu0 0
      %988 = vmatmul.mubr.bf16.gmra.mxu0 %v828
      %v989 = vpop.f32.mrf.mxu0
      %v990 = vadd.f32 %v850, %v989
      %v991 = vpop.f32.mrf.mxu0
      %v992 = vpop.f32.mrf.mxu0
      %v993 = vadd.f32 %v850, %v992
      %v994 = vpop.f32.mrf.mxu0
      %995 = vdwg.mxu0
      %v996 = vmax.f32 %v934, 0.0
      %v997 = vmax.f32 %v937, 0.0
      %v998 = vmax.f32 %v942, 0.0
      %v999 = vmax.f32 %v945, 0.0
      %v1000 = vmax.f32 %v950, 0.0
      %v1001 = vmax.f32 %v953, 0.0
      %v1002 = vmax.f32 %v958, 0.0
      %v1003 = vmax.f32 %v961, 0.0
      %v1004 = vmax.f32 %v966, 0.0
      %v1005 = vmax.f32 %v969, 0.0
      %v1006 = vmax.f32 %v974, 0.0
      %v1007 = vmax.f32 %v977, 0.0
      %v1008 = vmax.f32 %v982, 0.0
      %v1009 = vmax.f32 %v985, 0.0
      %v1010 = vmax.f32 %v990, 0.0
      %v1011 = vmax.f32 %v993, 0.0
      %v1012 = vpack.c.bf16 %v997, %v996
      %v1013 = vpack.c.bf16 %v999, %v998
      %v1014 = vpack.c.bf16 %v1001, %v1000
      %v1015 = vpack.c.bf16 %v1003, %v1002
      %v1016 = vpack.c.bf16 %v1005, %v1004
      %v1017 = vpack.c.bf16 %v1007, %v1006
      %v1018 = vpack.c.bf16 %v1009, %v1008
      %v1019 = vpack.c.bf16 %v1011, %v1010
      %s1020 = scalar_lea.vmem %s1, 256
      %v1021 = vld [vmem:[%s1020] sm:$0xf]
      %v1022 = vld [vmem:[%s1020 + $0x4] sm:$0xf]
      %v1023 = vld [vmem:[%s1020 + $0x8] sm:$0xf]
      %v1024 = vld [vmem:[%s1020 + $0xc] sm:$0xf]
      %v1025 = vld [vmem:[%s1020 + $0x10] sm:$0xf]
      %v1026 = vld [vmem:[%s1020 + $0x14] sm:$0xf]
      %v1027 = vld [vmem:[%s1020 + $0x18] sm:$0xf]
      %v1028 = vld [vmem:[%s1020 + $0x1c] sm:$0xf]
      %v1029 = vld [vmem:[%s1020 + $0x20] sm:$0xf]
      %v1030 = vld [vmem:[%s1020 + $0x24] sm:$0xf]
      %v1031 = vld [vmem:[%s1020 + $0x28] sm:$0xf]
      %v1032 = vld [vmem:[%s1020 + $0x2c] sm:$0xf]
      %v1033 = vld [vmem:[%s1020 + $0x30] sm:$0xf]
      %v1034 = vld [vmem:[%s1020 + $0x34] sm:$0xf]
      %v1035 = vld [vmem:[%s1020 + $0x38] sm:$0xf]
      %v1036 = vld [vmem:[%s1020 + $0x3c] sm:$0xf]
      %v1037 = vld [vmem:[%s2 + $0x6] sm:$0x1]
      %v1038 = vlaneseq
      %v1039 = vshrl.u32 %v1038, 7
      %v1040 = vsub.s32 0, %v1039
      %v1041 = vrot.slane %v1037, %v1040
      %v1058 = vunpack.c.l.b16 %v1021
      %v1059 = vunpack.c.l.b16 %v1022
      %v1060 = vunpack.c.l.b16 %v1023
      %v1061 = vunpack.c.l.b16 %v1024
      %v1062 = vunpack.c.l.b16 %v1025
      %v1063 = vunpack.c.l.b16 %v1026
      %v1064 = vunpack.c.l.b16 %v1027
      %v1065 = vunpack.c.l.b16 %v1028
      %v1066 = vunpack.c.l.b16 %v1029
      %v1067 = vunpack.c.l.b16 %v1030
      %v1068 = vunpack.c.l.b16 %v1031
      %v1069 = vunpack.c.l.b16 %v1032
      %v1070 = vunpack.c.l.b16 %v1033
      %v1071 = vunpack.c.l.b16 %v1034
      %v1072 = vunpack.c.l.b16 %v1035
      %v1073 = vunpack.c.l.b16 %v1036
      %v1074 = vpack.c.b16 %v1059, %v1058
      %v1075 = vpack.c.b16 %v1061, %v1060
      %v1076 = vpack.c.b16 %v1063, %v1062
      %v1077 = vpack.c.b16 %v1065, %v1064
      %v1078 = vpack.c.b16 %v1067, %v1066
      %v1079 = vpack.c.b16 %v1069, %v1068
      %v1080 = vpack.c.b16 %v1071, %v1070
      %v1081 = vpack.c.b16 %v1073, %v1072
      %1090 = vmatprep.subr.bf16.mxu0 0
      %1091 = vmatpush1.bf16.msra.mxu0 %v1081
      %1092 = vmatprep.subr.bf16.mxu0 0
      %1093 = vmatpush1.bf16.msra.mxu0 %v1080
      %1094 = vmatprep.subr.bf16.mxu0 0
      %1095 = vmatpush1.bf16.msra.mxu0 %v1079
      %1096 = vmatprep.subr.bf16.mxu0 0
      %1097 = vmatpush1.bf16.msra.mxu0 %v1078
      %1098 = vmatprep.subr.bf16.mxu0 0
      %1099 = vmatpush1.bf16.msra.mxu0 %v1077
      %1100 = vmatprep.subr.bf16.mxu0 0
      %1101 = vmatpush1.bf16.msra.mxu0 %v1076
      %1102 = vmatprep.subr.bf16.mxu0 0
      %1103 = vmatpush1.bf16.msra.mxu0 %v1075
      %1104 = vmatprep.subr.bf16.mxu0 0
      %1105 = vmatpush1.bf16.msra.mxu0 %v1074
      %1106 = vmatprep.subr.bf16.mxu0 0
      %1107 = vmatpush2.bf16.msra.mxu0 0
      %1108 = vmatprep.subr.bf16.mxu0 0
      %1109 = vmatpush2.bf16.msra.mxu0 0
      %1110 = vmatprep.subr.bf16.mxu0 0
      %1111 = vmatpush2.bf16.msra.mxu0 0
      %1112 = vmatprep.subr.bf16.mxu0 0
      %1113 = vmatpush2.bf16.msra.mxu0 0
      %1114 = vmatprep.subr.bf16.mxu0 0
      %1115 = vmatpush2.bf16.msra.mxu0 0
      %1116 = vmatprep.subr.bf16.mxu0 0
      %1117 = vmatpush2.bf16.msra.mxu0 0
      %1118 = vmatprep.subr.bf16.mxu0 0
      %1119 = vmatpush2.bf16.msra.mxu0 0
      %1120 = vmatprep.subr.bf16.mxu0 0
      %1121 = vmatpush2.bf16.msra.mxu0 0
      %1122 = vmatprep.mubr.bf16.mxu0 0
      %1123 = vmatmul.mubr.bf16.gmra.mxu0 %v1012
      %v1124 = vpop.f32.mrf.mxu0
      %v1125 = vadd.f32 %v1041, %v1124
      %v1126 = vpop.f32.mrf.mxu0
      %v1127 = vpop.f32.mrf.mxu0
      %v1128 = vadd.f32 %v1041, %v1127
      %v1129 = vpop.f32.mrf.mxu0
      %1130 = vmatprep.mubr.bf16.mxu0 0
      %1131 = vmatmul.mubr.bf16.gmra.mxu0 %v1013
      %v1132 = vpop.f32.mrf.mxu0
      %v1133 = vadd.f32 %v1041, %v1132
      %v1134 = vpop.f32.mrf.mxu0
      %v1135 = vpop.f32.mrf.mxu0
      %v1136 = vadd.f32 %v1041, %v1135
      %v1137 = vpop.f32.mrf.mxu0
      %1138 = vmatprep.mubr.bf16.mxu0 0
      %1139 = vmatmul.mubr.bf16.gmra.mxu0 %v1014
      %v1140 = vpop.f32.mrf.mxu0
      %v1141 = vadd.f32 %v1041, %v1140
      %v1142 = vpop.f32.mrf.mxu0
      %v1143 = vpop.f32.mrf.mxu0
      %v1144 = vadd.f32 %v1041, %v1143
      %v1145 = vpop.f32.mrf.mxu0
      %1146 = vmatprep.mubr.bf16.mxu0 0
      %1147 = vmatmul.mubr.bf16.gmra.mxu0 %v1015
      %v1148 = vpop.f32.mrf.mxu0
      %v1149 = vadd.f32 %v1041, %v1148
      %v1150 = vpop.f32.mrf.mxu0
      %v1151 = vpop.f32.mrf.mxu0
      %v1152 = vadd.f32 %v1041, %v1151
      %v1153 = vpop.f32.mrf.mxu0
      %1154 = vmatprep.mubr.bf16.mxu0 0
      %1155 = vmatmul.mubr.bf16.gmra.mxu0 %v1016
      %v1156 = vpop.f32.mrf.mxu0
      %v1157 = vadd.f32 %v1041, %v1156
      %v1158 = vpop.f32.mrf.mxu0
      %v1159 = vpop.f32.mrf.mxu0
      %v1160 = vadd.f32 %v1041, %v1159
      %v1161 = vpop.f32.mrf.mxu0
      %1162 = vmatprep.mubr.bf16.mxu0 0
      %1163 = vmatmul.mubr.bf16.gmra.mxu0 %v1017
      %v1164 = vpop.f32.mrf.mxu0
      %v1165 = vadd.f32 %v1041, %v1164
      %v1166 = vpop.f32.mrf.mxu0
      %v1167 = vpop.f32.mrf.mxu0
      %v1168 = vadd.f32 %v1041, %v1167
      %v1169 = vpop.f32.mrf.mxu0
      %1170 = vmatprep.mubr.bf16.mxu0 0
      %1171 = vmatmul.mubr.bf16.gmra.mxu0 %v1018
      %v1172 = vpop.f32.mrf.mxu0
      %v1173 = vadd.f32 %v1041, %v1172
      %v1174 = vpop.f32.mrf.mxu0
      %v1175 = vpop.f32.mrf.mxu0
      %v1176 = vadd.f32 %v1041, %v1175
      %v1177 = vpop.f32.mrf.mxu0
      %1178 = vmatprep.mubr.bf16.mxu0 0
      %1179 = vmatmul.mubr.bf16.gmra.mxu0 %v1019
      %v1180 = vpop.f32.mrf.mxu0
      %v1181 = vadd.f32 %v1041, %v1180
      %v1182 = vpop.f32.mrf.mxu0
      %v1183 = vpop.f32.mrf.mxu0
      %v1184 = vadd.f32 %v1041, %v1183
      %v1185 = vpop.f32.mrf.mxu0
      %1186 = vdwg.mxu0
      %v1187 = vmax.f32 %v1125, 0.0
      %v1188 = vmax.f32 %v1128, 0.0
      %v1189 = vmax.f32 %v1133, 0.0
      %v1190 = vmax.f32 %v1136, 0.0
      %v1191 = vmax.f32 %v1141, 0.0
      %v1192 = vmax.f32 %v1144, 0.0
      %v1193 = vmax.f32 %v1149, 0.0
      %v1194 = vmax.f32 %v1152, 0.0
      %v1195 = vmax.f32 %v1157, 0.0
      %v1196 = vmax.f32 %v1160, 0.0
      %v1197 = vmax.f32 %v1165, 0.0
      %v1198 = vmax.f32 %v1168, 0.0
      %v1199 = vmax.f32 %v1173, 0.0
      %v1200 = vmax.f32 %v1176, 0.0
      %v1201 = vmax.f32 %v1181, 0.0
      %v1202 = vmax.f32 %v1184, 0.0
      %v1203 = vld [vmem:[%s2 + $0x7] sm:$0x1]
      %v1204 = vlaneseq
      %v1205 = vshrl.u32 %v1204, 7
      %v1206 = vsub.s32 0, %v1205
      %v1207 = vrot.slane %v1203, %v1206
      %v1208 = vmul.f32 %v1187, %v1207
      %v1209 = vmul.f32 %v1188, %v1207
      %v1210 = vmul.f32 %v1189, %v1207
      %v1211 = vmul.f32 %v1190, %v1207
      %v1212 = vmul.f32 %v1191, %v1207
      %v1213 = vmul.f32 %v1192, %v1207
      %v1214 = vmul.f32 %v1193, %v1207
      %v1215 = vmul.f32 %v1194, %v1207
      %v1216 = vmul.f32 %v1195, %v1207
      %v1217 = vmul.f32 %v1196, %v1207
      %v1218 = vmul.f32 %v1197, %v1207
      %v1219 = vmul.f32 %v1198, %v1207
      %v1220 = vmul.f32 %v1199, %v1207
      %v1221 = vmul.f32 %v1200, %v1207
      %v1222 = vmul.f32 %v1201, %v1207
      %v1223 = vmul.f32 %v1202, %v1207
      %v1224 = vld [vmem:[%s2 + $0x8] sm:$0x1]
      %v1225 = vlaneseq
      %v1226 = vshrl.u32 %v1225, 7
      %v1227 = vsub.s32 0, %v1226
      %v1228 = vrot.slane %v1224, %v1227
      %v1229 = vadd.f32 %v1208, %v1228
      %v1230 = vadd.f32 %v1209, %v1228
      %v1231 = vadd.f32 %v1210, %v1228
      %v1232 = vadd.f32 %v1211, %v1228
      %v1233 = vadd.f32 %v1212, %v1228
      %v1234 = vadd.f32 %v1213, %v1228
      %v1235 = vadd.f32 %v1214, %v1228
      %v1236 = vadd.f32 %v1215, %v1228
      %v1237 = vadd.f32 %v1216, %v1228
      %v1238 = vadd.f32 %v1217, %v1228
      %v1239 = vadd.f32 %v1218, %v1228
      %v1240 = vadd.f32 %v1219, %v1228
      %v1241 = vadd.f32 %v1220, %v1228
      %v1242 = vadd.f32 %v1221, %v1228
      %v1243 = vadd.f32 %v1222, %v1228
      %v1244 = vadd.f32 %v1223, %v1228
      %v1245 = vadd.f32 %v805, %v1229
      %v1246 = vadd.f32 %v806, %v1230
      %v1247 = vadd.f32 %v807, %v1231
      %v1248 = vadd.f32 %v808, %v1232
      %v1249 = vadd.f32 %v809, %v1233
      %v1250 = vadd.f32 %v810, %v1234
      %v1251 = vadd.f32 %v811, %v1235
      %v1252 = vadd.f32 %v812, %v1236
      %v1253 = vadd.f32 %v813, %v1237
      %v1254 = vadd.f32 %v814, %v1238
      %v1255 = vadd.f32 %v815, %v1239
      %v1256 = vadd.f32 %v816, %v1240
      %v1257 = vadd.f32 %v817, %v1241
      %v1258 = vadd.f32 %v818, %v1242
      %v1259 = vadd.f32 %v819, %v1243
      %v1260 = vadd.f32 %v820, %v1244
      %v1261 = vpack.c.bf16 %v1246, %v1245
      %v1262 = vpack.c.bf16 %v1248, %v1247
      %v1263 = vpack.c.bf16 %v1250, %v1249
      %v1264 = vpack.c.bf16 %v1252, %v1251
      %v1265 = vpack.c.bf16 %v1254, %v1253
      %v1266 = vpack.c.bf16 %v1256, %v1255
      %v1267 = vpack.c.bf16 %v1258, %v1257
      %v1268 = vpack.c.bf16 %v1260, %v1259
      %s1269 = scalar_lea.vmem %s1, 320
      %v1270 = vld [vmem:[%s1269] sm:$0xf]
      %v1271 = vld [vmem:[%s1269 + $0x4] sm:$0xf]
      %v1272 = vld [vmem:[%s1269 + $0x8] sm:$0xf]
      %v1273 = vld [vmem:[%s1269 + $0xc] sm:$0xf]
      %v1274 = vld [vmem:[%s1269 + $0x10] sm:$0xf]
      %v1275 = vld [vmem:[%s1269 + $0x14] sm:$0xf]
      %v1276 = vld [vmem:[%s1269 + $0x18] sm:$0xf]
      %v1277 = vld [vmem:[%s1269 + $0x1c] sm:$0xf]
      %v1278 = vld [vmem:[%s1269 + $0x20] sm:$0xf]
      %v1279 = vld [vmem:[%s1269 + $0x24] sm:$0xf]
      %v1280 = vld [vmem:[%s1269 + $0x28] sm:$0xf]
      %v1281 = vld [vmem:[%s1269 + $0x2c] sm:$0xf]
      %v1282 = vld [vmem:[%s1269 + $0x30] sm:$0xf]
      %v1283 = vld [vmem:[%s1269 + $0x34] sm:$0xf]
      %v1284 = vld [vmem:[%s1269 + $0x38] sm:$0xf]
      %v1285 = vld [vmem:[%s1269 + $0x3c] sm:$0xf]
      %v1286 = vld [vmem:[%s2 + $0x9] sm:$0x1]
      %v1287 = vlaneseq
      %v1288 = vshrl.u32 %v1287, 7
      %v1289 = vsub.s32 0, %v1288
      %v1290 = vrot.slane %v1286, %v1289
      %v1307 = vunpack.c.l.b16 %v1270
      %v1308 = vunpack.c.l.b16 %v1271
      %v1309 = vunpack.c.l.b16 %v1272
      %v1310 = vunpack.c.l.b16 %v1273
      %v1311 = vunpack.c.l.b16 %v1274
      %v1312 = vunpack.c.l.b16 %v1275
      %v1313 = vunpack.c.l.b16 %v1276
      %v1314 = vunpack.c.l.b16 %v1277
      %v1315 = vunpack.c.l.b16 %v1278
      %v1316 = vunpack.c.l.b16 %v1279
      %v1317 = vunpack.c.l.b16 %v1280
      %v1318 = vunpack.c.l.b16 %v1281
      %v1319 = vunpack.c.l.b16 %v1282
      %v1320 = vunpack.c.l.b16 %v1283
      %v1321 = vunpack.c.l.b16 %v1284
      %v1322 = vunpack.c.l.b16 %v1285
      %v1323 = vpack.c.b16 %v1308, %v1307
      %v1324 = vpack.c.b16 %v1310, %v1309
      %v1325 = vpack.c.b16 %v1312, %v1311
      %v1326 = vpack.c.b16 %v1314, %v1313
      %v1327 = vpack.c.b16 %v1316, %v1315
      %v1328 = vpack.c.b16 %v1318, %v1317
      %v1329 = vpack.c.b16 %v1320, %v1319
      %v1330 = vpack.c.b16 %v1322, %v1321
      %1339 = vmatprep.subr.bf16.mxu0 0
      %1340 = vmatpush1.bf16.msra.mxu0 %v1330
      %1341 = vmatprep.subr.bf16.mxu0 0
      %1342 = vmatpush1.bf16.msra.mxu0 %v1329
      %1343 = vmatprep.subr.bf16.mxu0 0
      %1344 = vmatpush1.bf16.msra.mxu0 %v1328
      %1345 = vmatprep.subr.bf16.mxu0 0
      %1346 = vmatpush1.bf16.msra.mxu0 %v1327
      %1347 = vmatprep.subr.bf16.mxu0 0
      %1348 = vmatpush1.bf16.msra.mxu0 %v1326
      %1349 = vmatprep.subr.bf16.mxu0 0
      %1350 = vmatpush1.bf16.msra.mxu0 %v1325
      %1351 = vmatprep.subr.bf16.mxu0 0
      %1352 = vmatpush1.bf16.msra.mxu0 %v1324
      %1353 = vmatprep.subr.bf16.mxu0 0
      %1354 = vmatpush1.bf16.msra.mxu0 %v1323
      %1355 = vmatprep.subr.bf16.mxu0 0
      %1356 = vmatpush2.bf16.msra.mxu0 0
      %1357 = vmatprep.subr.bf16.mxu0 0
      %1358 = vmatpush2.bf16.msra.mxu0 0
      %1359 = vmatprep.subr.bf16.mxu0 0
      %1360 = vmatpush2.bf16.msra.mxu0 0
      %1361 = vmatprep.subr.bf16.mxu0 0
      %1362 = vmatpush2.bf16.msra.mxu0 0
      %1363 = vmatprep.subr.bf16.mxu0 0
      %1364 = vmatpush2.bf16.msra.mxu0 0
      %1365 = vmatprep.subr.bf16.mxu0 0
      %1366 = vmatpush2.bf16.msra.mxu0 0
      %1367 = vmatprep.subr.bf16.mxu0 0
      %1368 = vmatpush2.bf16.msra.mxu0 0
      %1369 = vmatprep.subr.bf16.mxu0 0
      %1370 = vmatpush2.bf16.msra.mxu0 0
      %1371 = vmatprep.mubr.bf16.mxu0 0
      %1372 = vmatmul.mubr.bf16.gmra.mxu0 %v1261
      %v1373 = vpop.f32.mrf.mxu0
      %v1374 = vadd.f32 %v1290, %v1373
      %v1375 = vpop.f32.mrf.mxu0
      %v1376 = vpop.f32.mrf.mxu0
      %v1377 = vadd.f32 %v1290, %v1376
      %v1378 = vpop.f32.mrf.mxu0
      %1379 = vmatprep.mubr.bf16.mxu0 0
      %1380 = vmatmul.mubr.bf16.gmra.mxu0 %v1262
      %v1381 = vpop.f32.mrf.mxu0
      %v1382 = vadd.f32 %v1290, %v1381
      %v1383 = vpop.f32.mrf.mxu0
      %v1384 = vpop.f32.mrf.mxu0
      %v1385 = vadd.f32 %v1290, %v1384
      %v1386 = vpop.f32.mrf.mxu0
      %1387 = vmatprep.mubr.bf16.mxu0 0
      %1388 = vmatmul.mubr.bf16.gmra.mxu0 %v1263
      %v1389 = vpop.f32.mrf.mxu0
      %v1390 = vadd.f32 %v1290, %v1389
      %v1391 = vpop.f32.mrf.mxu0
      %v1392 = vpop.f32.mrf.mxu0
      %v1393 = vadd.f32 %v1290, %v1392
      %v1394 = vpop.f32.mrf.mxu0
      %1395 = vmatprep.mubr.bf16.mxu0 0
      %1396 = vmatmul.mubr.bf16.gmra.mxu0 %v1264
      %v1397 = vpop.f32.mrf.mxu0
      %v1398 = vadd.f32 %v1290, %v1397
      %v1399 = vpop.f32.mrf.mxu0
      %v1400 = vpop.f32.mrf.mxu0
      %v1401 = vadd.f32 %v1290, %v1400
      %v1402 = vpop.f32.mrf.mxu0
      %1403 = vmatprep.mubr.bf16.mxu0 0
      %1404 = vmatmul.mubr.bf16.gmra.mxu0 %v1265
      %v1405 = vpop.f32.mrf.mxu0
      %v1406 = vadd.f32 %v1290, %v1405
      %v1407 = vpop.f32.mrf.mxu0
      %v1408 = vpop.f32.mrf.mxu0
      %v1409 = vadd.f32 %v1290, %v1408
      %v1410 = vpop.f32.mrf.mxu0
      %1411 = vmatprep.mubr.bf16.mxu0 0
      %1412 = vmatmul.mubr.bf16.gmra.mxu0 %v1266
      %v1413 = vpop.f32.mrf.mxu0
      %v1414 = vadd.f32 %v1290, %v1413
      %v1415 = vpop.f32.mrf.mxu0
      %v1416 = vpop.f32.mrf.mxu0
      %v1417 = vadd.f32 %v1290, %v1416
      %v1418 = vpop.f32.mrf.mxu0
      %1419 = vmatprep.mubr.bf16.mxu0 0
      %1420 = vmatmul.mubr.bf16.gmra.mxu0 %v1267
      %v1421 = vpop.f32.mrf.mxu0
      %v1422 = vadd.f32 %v1290, %v1421
      %v1423 = vpop.f32.mrf.mxu0
      %v1424 = vpop.f32.mrf.mxu0
      %v1425 = vadd.f32 %v1290, %v1424
      %v1426 = vpop.f32.mrf.mxu0
      %1427 = vmatprep.mubr.bf16.mxu0 0
      %1428 = vmatmul.mubr.bf16.gmra.mxu0 %v1268
      %v1429 = vpop.f32.mrf.mxu0
      %v1430 = vadd.f32 %v1290, %v1429
      %v1431 = vpop.f32.mrf.mxu0
      %v1432 = vpop.f32.mrf.mxu0
      %v1433 = vadd.f32 %v1290, %v1432
      %v1434 = vpop.f32.mrf.mxu0
      %1435 = vdwg.mxu0
      %v1436 = vmax.f32 %v1374, 0.0
      %v1437 = vmax.f32 %v1377, 0.0
      %v1438 = vmax.f32 %v1382, 0.0
      %v1439 = vmax.f32 %v1385, 0.0
      %v1440 = vmax.f32 %v1390, 0.0
      %v1441 = vmax.f32 %v1393, 0.0
      %v1442 = vmax.f32 %v1398, 0.0
      %v1443 = vmax.f32 %v1401, 0.0
      %v1444 = vmax.f32 %v1406, 0.0
      %v1445 = vmax.f32 %v1409, 0.0
      %v1446 = vmax.f32 %v1414, 0.0
      %v1447 = vmax.f32 %v1417, 0.0
      %v1448 = vmax.f32 %v1422, 0.0
      %v1449 = vmax.f32 %v1425, 0.0
      %v1450 = vmax.f32 %v1430, 0.0
      %v1451 = vmax.f32 %v1433, 0.0
      %v1452 = vpack.c.bf16 %v1437, %v1436
      %v1453 = vpack.c.bf16 %v1439, %v1438
      %v1454 = vpack.c.bf16 %v1441, %v1440
      %v1455 = vpack.c.bf16 %v1443, %v1442
      %v1456 = vpack.c.bf16 %v1445, %v1444
      %v1457 = vpack.c.bf16 %v1447, %v1446
      %v1458 = vpack.c.bf16 %v1449, %v1448
      %v1459 = vpack.c.bf16 %v1451, %v1450
      %s1460 = scalar_lea.vmem %s1, 384
      %v1461 = vld [vmem:[%s1460] sm:$0xf]
      %v1462 = vld [vmem:[%s1460 + $0x4] sm:$0xf]
      %v1463 = vld [vmem:[%s1460 + $0x8] sm:$0xf]
      %v1464 = vld [vmem:[%s1460 + $0xc] sm:$0xf]
      %v1465 = vld [vmem:[%s1460 + $0x10] sm:$0xf]
      %v1466 = vld [vmem:[%s1460 + $0x14] sm:$0xf]
      %v1467 = vld [vmem:[%s1460 + $0x18] sm:$0xf]
      %v1468 = vld [vmem:[%s1460 + $0x1c] sm:$0xf]
      %v1469 = vld [vmem:[%s1460 + $0x20] sm:$0xf]
      %v1470 = vld [vmem:[%s1460 + $0x24] sm:$0xf]
      %v1471 = vld [vmem:[%s1460 + $0x28] sm:$0xf]
      %v1472 = vld [vmem:[%s1460 + $0x2c] sm:$0xf]
      %v1473 = vld [vmem:[%s1460 + $0x30] sm:$0xf]
      %v1474 = vld [vmem:[%s1460 + $0x34] sm:$0xf]
      %v1475 = vld [vmem:[%s1460 + $0x38] sm:$0xf]
      %v1476 = vld [vmem:[%s1460 + $0x3c] sm:$0xf]
      %v1477 = vld [vmem:[%s2 + $0xa] sm:$0x1]
      %v1478 = vlaneseq
      %v1479 = vshrl.u32 %v1478, 7
      %v1480 = vsub.s32 0, %v1479
      %v1481 = vrot.slane %v1477, %v1480
      %v1498 = vunpack.c.l.b16 %v1461
      %v1499 = vunpack.c.l.b16 %v1462
      %v1500 = vunpack.c.l.b16 %v1463
      %v1501 = vunpack.c.l.b16 %v1464
      %v1502 = vunpack.c.l.b16 %v1465
      %v1503 = vunpack.c.l.b16 %v1466
      %v1504 = vunpack.c.l.b16 %v1467
      %v1505 = vunpack.c.l.b16 %v1468
      %v1506 = vunpack.c.l.b16 %v1469
      %v1507 = vunpack.c.l.b16 %v1470
      %v1508 = vunpack.c.l.b16 %v1471
      %v1509 = vunpack.c.l.b16 %v1472
      %v1510 = vunpack.c.l.b16 %v1473
      %v1511 = vunpack.c.l.b16 %v1474
      %v1512 = vunpack.c.l.b16 %v1475
      %v1513 = vunpack.c.l.b16 %v1476
      %v1514 = vpack.c.b16 %v1499, %v1498
      %v1515 = vpack.c.b16 %v1501, %v1500
      %v1516 = vpack.c.b16 %v1503, %v1502
      %v1517 = vpack.c.b16 %v1505, %v1504
      %v1518 = vpack.c.b16 %v1507, %v1506
      %v1519 = vpack.c.b16 %v1509, %v1508
      %v1520 = vpack.c.b16 %v1511, %v1510
      %v1521 = vpack.c.b16 %v1513, %v1512
      %1530 = vmatprep.subr.bf16.mxu0 0
      %1531 = vmatpush1.bf16.msra.mxu0 %v1521
      %1532 = vmatprep.subr.bf16.mxu0 0
      %1533 = vmatpush1.bf16.msra.mxu0 %v1520
      %1534 = vmatprep.subr.bf16.mxu0 0
      %1535 = vmatpush1.bf16.msra.mxu0 %v1519
      %1536 = vmatprep.subr.bf16.mxu0 0
      %1537 = vmatpush1.bf16.msra.mxu0 %v1518
      %1538 = vmatprep.subr.bf16.mxu0 0
      %1539 = vmatpush1.bf16.msra.mxu0 %v1517
      %1540 = vmatprep.subr.bf16.mxu0 0
      %1541 = vmatpush1.bf16.msra.mxu0 %v1516
      %1542 = vmatprep.subr.bf16.mxu0 0
      %1543 = vmatpush1.bf16.msra.mxu0 %v1515
      %1544 = vmatprep.subr.bf16.mxu0 0
      %1545 = vmatpush1.bf16.msra.mxu0 %v1514
      %1546 = vmatprep.subr.bf16.mxu0 0
      %1547 = vmatpush2.bf16.msra.mxu0 0
      %1548 = vmatprep.subr.bf16.mxu0 0
      %1549 = vmatpush2.bf16.msra.mxu0 0
      %1550 = vmatprep.subr.bf16.mxu0 0
      %1551 = vmatpush2.bf16.msra.mxu0 0
      %1552 = vmatprep.subr.bf16.mxu0 0
      %1553 = vmatpush2.bf16.msra.mxu0 0
      %1554 = vmatprep.subr.bf16.mxu0 0
      %1555 = vmatpush2.bf16.msra.mxu0 0
      %1556 = vmatprep.subr.bf16.mxu0 0
      %1557 = vmatpush2.bf16.msra.mxu0 0
      %1558 = vmatprep.subr.bf16.mxu0 0
      %1559 = vmatpush2.bf16.msra.mxu0 0
      %1560 = vmatprep.subr.bf16.mxu0 0
      %1561 = vmatpush2.bf16.msra.mxu0 0
      %1562 = vmatprep.mubr.bf16.mxu0 0
      %1563 = vmatmul.mubr.bf16.gmra.mxu0 %v1452
      %v1564 = vpop.f32.mrf.mxu0
      %v1565 = vadd.f32 %v1481, %v1564
      %v1566 = vpop.f32.mrf.mxu0
      %v1567 = vpop.f32.mrf.mxu0
      %v1568 = vadd.f32 %v1481, %v1567
      %v1569 = vpop.f32.mrf.mxu0
      %1570 = vmatprep.mubr.bf16.mxu0 0
      %1571 = vmatmul.mubr.bf16.gmra.mxu0 %v1453
      %v1572 = vpop.f32.mrf.mxu0
      %v1573 = vadd.f32 %v1481, %v1572
      %v1574 = vpop.f32.mrf.mxu0
      %v1575 = vpop.f32.mrf.mxu0
      %v1576 = vadd.f32 %v1481, %v1575
      %v1577 = vpop.f32.mrf.mxu0
      %1578 = vmatprep.mubr.bf16.mxu0 0
      %1579 = vmatmul.mubr.bf16.gmra.mxu0 %v1454
      %v1580 = vpop.f32.mrf.mxu0
      %v1581 = vadd.f32 %v1481, %v1580
      %v1582 = vpop.f32.mrf.mxu0
      %v1583 = vpop.f32.mrf.mxu0
      %v1584 = vadd.f32 %v1481, %v1583
      %v1585 = vpop.f32.mrf.mxu0
      %1586 = vmatprep.mubr.bf16.mxu0 0
      %1587 = vmatmul.mubr.bf16.gmra.mxu0 %v1455
      %v1588 = vpop.f32.mrf.mxu0
      %v1589 = vadd.f32 %v1481, %v1588
      %v1590 = vpop.f32.mrf.mxu0
      %v1591 = vpop.f32.mrf.mxu0
      %v1592 = vadd.f32 %v1481, %v1591
      %v1593 = vpop.f32.mrf.mxu0
      %1594 = vmatprep.mubr.bf16.mxu0 0
      %1595 = vmatmul.mubr.bf16.gmra.mxu0 %v1456
      %v1596 = vpop.f32.mrf.mxu0
      %v1597 = vadd.f32 %v1481, %v1596
      %v1598 = vpop.f32.mrf.mxu0
      %v1599 = vpop.f32.mrf.mxu0
      %v1600 = vadd.f32 %v1481, %v1599
      %v1601 = vpop.f32.mrf.mxu0
      %1602 = vmatprep.mubr.bf16.mxu0 0
      %1603 = vmatmul.mubr.bf16.gmra.mxu0 %v1457
      %v1604 = vpop.f32.mrf.mxu0
      %v1605 = vadd.f32 %v1481, %v1604
      %v1606 = vpop.f32.mrf.mxu0
      %v1607 = vpop.f32.mrf.mxu0
      %v1608 = vadd.f32 %v1481, %v1607
      %v1609 = vpop.f32.mrf.mxu0
      %1610 = vmatprep.mubr.bf16.mxu0 0
      %1611 = vmatmul.mubr.bf16.gmra.mxu0 %v1458
      %v1612 = vpop.f32.mrf.mxu0
      %v1613 = vadd.f32 %v1481, %v1612
      %v1614 = vpop.f32.mrf.mxu0
      %v1615 = vpop.f32.mrf.mxu0
      %v1616 = vadd.f32 %v1481, %v1615
      %v1617 = vpop.f32.mrf.mxu0
      %1618 = vmatprep.mubr.bf16.mxu0 0
      %1619 = vmatmul.mubr.bf16.gmra.mxu0 %v1459
      %v1620 = vpop.f32.mrf.mxu0
      %v1621 = vadd.f32 %v1481, %v1620
      %v1622 = vpop.f32.mrf.mxu0
      %v1623 = vpop.f32.mrf.mxu0
      %v1624 = vadd.f32 %v1481, %v1623
      %v1625 = vpop.f32.mrf.mxu0
      %1626 = vdwg.mxu0
      %v1627 = vmax.f32 %v1565, 0.0
      %v1628 = vmax.f32 %v1568, 0.0
      %v1629 = vmax.f32 %v1573, 0.0
      %v1630 = vmax.f32 %v1576, 0.0
      %v1631 = vmax.f32 %v1581, 0.0
      %v1632 = vmax.f32 %v1584, 0.0
      %v1633 = vmax.f32 %v1589, 0.0
      %v1634 = vmax.f32 %v1592, 0.0
      %v1635 = vmax.f32 %v1597, 0.0
      %v1636 = vmax.f32 %v1600, 0.0
      %v1637 = vmax.f32 %v1605, 0.0
      %v1638 = vmax.f32 %v1608, 0.0
      %v1639 = vmax.f32 %v1613, 0.0
      %v1640 = vmax.f32 %v1616, 0.0
      %v1641 = vmax.f32 %v1621, 0.0
      %v1642 = vmax.f32 %v1624, 0.0
      %v1643 = vpack.c.bf16 %v1628, %v1627
      %v1644 = vpack.c.bf16 %v1630, %v1629
      %v1645 = vpack.c.bf16 %v1632, %v1631
      %v1646 = vpack.c.bf16 %v1634, %v1633
      %v1647 = vpack.c.bf16 %v1636, %v1635
      %v1648 = vpack.c.bf16 %v1638, %v1637
      %v1649 = vpack.c.bf16 %v1640, %v1639
      %v1650 = vpack.c.bf16 %v1642, %v1641
      %s1651 = scalar_lea.vmem %s1, 448
      %v1652 = vld [vmem:[%s1651] sm:$0xf]
      %v1653 = vld [vmem:[%s1651 + $0x4] sm:$0xf]
      %v1654 = vld [vmem:[%s1651 + $0x8] sm:$0xf]
      %v1655 = vld [vmem:[%s1651 + $0xc] sm:$0xf]
      %v1656 = vld [vmem:[%s1651 + $0x10] sm:$0xf]
      %v1657 = vld [vmem:[%s1651 + $0x14] sm:$0xf]
      %v1658 = vld [vmem:[%s1651 + $0x18] sm:$0xf]
      %v1659 = vld [vmem:[%s1651 + $0x1c] sm:$0xf]
      %v1660 = vld [vmem:[%s1651 + $0x20] sm:$0xf]
      %v1661 = vld [vmem:[%s1651 + $0x24] sm:$0xf]
      %v1662 = vld [vmem:[%s1651 + $0x28] sm:$0xf]
      %v1663 = vld [vmem:[%s1651 + $0x2c] sm:$0xf]
      %v1664 = vld [vmem:[%s1651 + $0x30] sm:$0xf]
      %v1665 = vld [vmem:[%s1651 + $0x34] sm:$0xf]
      %v1666 = vld [vmem:[%s1651 + $0x38] sm:$0xf]
      %v1667 = vld [vmem:[%s1651 + $0x3c] sm:$0xf]
      %v1668 = vld [vmem:[%s2 + $0xb] sm:$0x1]
      %v1669 = vlaneseq
      %v1670 = vshrl.u32 %v1669, 7
      %v1671 = vsub.s32 0, %v1670
      %v1672 = vrot.slane %v1668, %v1671
      %v1689 = vunpack.c.l.b16 %v1652
      %v1690 = vunpack.c.l.b16 %v1653
      %v1691 = vunpack.c.l.b16 %v1654
      %v1692 = vunpack.c.l.b16 %v1655
      %v1693 = vunpack.c.l.b16 %v1656
      %v1694 = vunpack.c.l.b16 %v1657
      %v1695 = vunpack.c.l.b16 %v1658
      %v1696 = vunpack.c.l.b16 %v1659
      %v1697 = vunpack.c.l.b16 %v1660
      %v1698 = vunpack.c.l.b16 %v1661
      %v1699 = vunpack.c.l.b16 %v1662
      %v1700 = vunpack.c.l.b16 %v1663
      %v1701 = vunpack.c.l.b16 %v1664
      %v1702 = vunpack.c.l.b16 %v1665
      %v1703 = vunpack.c.l.b16 %v1666
      %v1704 = vunpack.c.l.b16 %v1667
      %v1705 = vpack.c.b16 %v1690, %v1689
      %v1706 = vpack.c.b16 %v1692, %v1691
      %v1707 = vpack.c.b16 %v1694, %v1693
      %v1708 = vpack.c.b16 %v1696, %v1695
      %v1709 = vpack.c.b16 %v1698, %v1697
      %v1710 = vpack.c.b16 %v1700, %v1699
      %v1711 = vpack.c.b16 %v1702, %v1701
      %v1712 = vpack.c.b16 %v1704, %v1703
      %1721 = vmatprep.subr.bf16.mxu0 0
      %1722 = vmatpush1.bf16.msra.mxu0 %v1712
      %1723 = vmatprep.subr.bf16.mxu0 0
      %1724 = vmatpush1.bf16.msra.mxu0 %v1711
      %1725 = vmatprep.subr.bf16.mxu0 0
      %1726 = vmatpush1.bf16.msra.mxu0 %v1710
      %1727 = vmatprep.subr.bf16.mxu0 0
      %1728 = vmatpush1.bf16.msra.mxu0 %v1709
      %1729 = vmatprep.subr.bf16.mxu0 0
      %1730 = vmatpush1.bf16.msra.mxu0 %v1708
      %1731 = vmatprep.subr.bf16.mxu0 0
      %1732 = vmatpush1.bf16.msra.mxu0 %v1707
      %1733 = vmatprep.subr.bf16.mxu0 0
      %1734 = vmatpush1.bf16.msra.mxu0 %v1706
      %1735 = vmatprep.subr.bf16.mxu0 0
      %1736 = vmatpush1.bf16.msra.mxu0 %v1705
      %1737 = vmatprep.subr.bf16.mxu0 0
      %1738 = vmatpush2.bf16.msra.mxu0 0
      %1739 = vmatprep.subr.bf16.mxu0 0
      %1740 = vmatpush2.bf16.msra.mxu0 0
      %1741 = vmatprep.subr.bf16.mxu0 0
      %1742 = vmatpush2.bf16.msra.mxu0 0
      %1743 = vmatprep.subr.bf16.mxu0 0
      %1744 = vmatpush2.bf16.msra.mxu0 0
      %1745 = vmatprep.subr.bf16.mxu0 0
      %1746 = vmatpush2.bf16.msra.mxu0 0
      %1747 = vmatprep.subr.bf16.mxu0 0
      %1748 = vmatpush2.bf16.msra.mxu0 0
      %1749 = vmatprep.subr.bf16.mxu0 0
      %1750 = vmatpush2.bf16.msra.mxu0 0
      %1751 = vmatprep.subr.bf16.mxu0 0
      %1752 = vmatpush2.bf16.msra.mxu0 0
      %1753 = vmatprep.mubr.bf16.mxu0 0
      %1754 = vmatmul.mubr.bf16.gmra.mxu0 %v1643
      %v1755 = vpop.f32.mrf.mxu0
      %v1756 = vadd.f32 %v1672, %v1755
      %v1757 = vpop.f32.mrf.mxu0
      %v1758 = vpop.f32.mrf.mxu0
      %v1759 = vadd.f32 %v1672, %v1758
      %v1760 = vpop.f32.mrf.mxu0
      %1761 = vmatprep.mubr.bf16.mxu0 0
      %1762 = vmatmul.mubr.bf16.gmra.mxu0 %v1644
      %v1763 = vpop.f32.mrf.mxu0
      %v1764 = vadd.f32 %v1672, %v1763
      %v1765 = vpop.f32.mrf.mxu0
      %v1766 = vpop.f32.mrf.mxu0
      %v1767 = vadd.f32 %v1672, %v1766
      %v1768 = vpop.f32.mrf.mxu0
      %1769 = vmatprep.mubr.bf16.mxu0 0
      %1770 = vmatmul.mubr.bf16.gmra.mxu0 %v1645
      %v1771 = vpop.f32.mrf.mxu0
      %v1772 = vadd.f32 %v1672, %v1771
      %v1773 = vpop.f32.mrf.mxu0
      %v1774 = vpop.f32.mrf.mxu0
      %v1775 = vadd.f32 %v1672, %v1774
      %v1776 = vpop.f32.mrf.mxu0
      %1777 = vmatprep.mubr.bf16.mxu0 0
      %1778 = vmatmul.mubr.bf16.gmra.mxu0 %v1646
      %v1779 = vpop.f32.mrf.mxu0
      %v1780 = vadd.f32 %v1672, %v1779
      %v1781 = vpop.f32.mrf.mxu0
      %v1782 = vpop.f32.mrf.mxu0
      %v1783 = vadd.f32 %v1672, %v1782
      %v1784 = vpop.f32.mrf.mxu0
      %1785 = vmatprep.mubr.bf16.mxu0 0
      %1786 = vmatmul.mubr.bf16.gmra.mxu0 %v1647
      %v1787 = vpop.f32.mrf.mxu0
      %v1788 = vadd.f32 %v1672, %v1787
      %v1789 = vpop.f32.mrf.mxu0
      %v1790 = vpop.f32.mrf.mxu0
      %v1791 = vadd.f32 %v1672, %v1790
      %v1792 = vpop.f32.mrf.mxu0
      %1793 = vmatprep.mubr.bf16.mxu0 0
      %1794 = vmatmul.mubr.bf16.gmra.mxu0 %v1648
      %v1795 = vpop.f32.mrf.mxu0
      %v1796 = vadd.f32 %v1672, %v1795
      %v1797 = vpop.f32.mrf.mxu0
      %v1798 = vpop.f32.mrf.mxu0
      %v1799 = vadd.f32 %v1672, %v1798
      %v1800 = vpop.f32.mrf.mxu0
      %1801 = vmatprep.mubr.bf16.mxu0 0
      %1802 = vmatmul.mubr.bf16.gmra.mxu0 %v1649
      %v1803 = vpop.f32.mrf.mxu0
      %v1804 = vadd.f32 %v1672, %v1803
      %v1805 = vpop.f32.mrf.mxu0
      %v1806 = vpop.f32.mrf.mxu0
      %v1807 = vadd.f32 %v1672, %v1806
      %v1808 = vpop.f32.mrf.mxu0
      %1809 = vmatprep.mubr.bf16.mxu0 0
      %1810 = vmatmul.mubr.bf16.gmra.mxu0 %v1650
      %v1811 = vpop.f32.mrf.mxu0
      %v1812 = vadd.f32 %v1672, %v1811
      %v1813 = vpop.f32.mrf.mxu0
      %v1814 = vpop.f32.mrf.mxu0
      %v1815 = vadd.f32 %v1672, %v1814
      %v1816 = vpop.f32.mrf.mxu0
      %1817 = vdwg.mxu0
      %v1818 = vmax.f32 %v1756, 0.0
      %v1819 = vmax.f32 %v1759, 0.0
      %v1820 = vmax.f32 %v1764, 0.0
      %v1821 = vmax.f32 %v1767, 0.0
      %v1822 = vmax.f32 %v1772, 0.0
      %v1823 = vmax.f32 %v1775, 0.0
      %v1824 = vmax.f32 %v1780, 0.0
      %v1825 = vmax.f32 %v1783, 0.0
      %v1826 = vmax.f32 %v1788, 0.0
      %v1827 = vmax.f32 %v1791, 0.0
      %v1828 = vmax.f32 %v1796, 0.0
      %v1829 = vmax.f32 %v1799, 0.0
      %v1830 = vmax.f32 %v1804, 0.0
      %v1831 = vmax.f32 %v1807, 0.0
      %v1832 = vmax.f32 %v1812, 0.0
      %v1833 = vmax.f32 %v1815, 0.0
      %v1834 = vld [vmem:[%s2 + $0xc] sm:$0x1]
      %v1835 = vlaneseq
      %v1836 = vshrl.u32 %v1835, 7
      %v1837 = vsub.s32 0, %v1836
      %v1838 = vrot.slane %v1834, %v1837
      %v1839 = vmul.f32 %v1818, %v1838
      %v1840 = vmul.f32 %v1819, %v1838
      %v1841 = vmul.f32 %v1820, %v1838
      %v1842 = vmul.f32 %v1821, %v1838
      %v1843 = vmul.f32 %v1822, %v1838
      %v1844 = vmul.f32 %v1823, %v1838
      %v1845 = vmul.f32 %v1824, %v1838
      %v1846 = vmul.f32 %v1825, %v1838
      %v1847 = vmul.f32 %v1826, %v1838
      %v1848 = vmul.f32 %v1827, %v1838
      %v1849 = vmul.f32 %v1828, %v1838
      %v1850 = vmul.f32 %v1829, %v1838
      %v1851 = vmul.f32 %v1830, %v1838
      %v1852 = vmul.f32 %v1831, %v1838
      %v1853 = vmul.f32 %v1832, %v1838
      %v1854 = vmul.f32 %v1833, %v1838
      %v1855 = vld [vmem:[%s2 + $0xd] sm:$0x1]
      %v1856 = vlaneseq
      %v1857 = vshrl.u32 %v1856, 7
      %v1858 = vsub.s32 0, %v1857
      %v1859 = vrot.slane %v1855, %v1858
      %v1860 = vadd.f32 %v1839, %v1859
      %v1861 = vadd.f32 %v1840, %v1859
      %v1862 = vadd.f32 %v1841, %v1859
      %v1863 = vadd.f32 %v1842, %v1859
      %v1864 = vadd.f32 %v1843, %v1859
      %v1865 = vadd.f32 %v1844, %v1859
      %v1866 = vadd.f32 %v1845, %v1859
      %v1867 = vadd.f32 %v1846, %v1859
      %v1868 = vadd.f32 %v1847, %v1859
      %v1869 = vadd.f32 %v1848, %v1859
      %v1870 = vadd.f32 %v1849, %v1859
      %v1871 = vadd.f32 %v1850, %v1859
      %v1872 = vadd.f32 %v1851, %v1859
      %v1873 = vadd.f32 %v1852, %v1859
      %v1874 = vadd.f32 %v1853, %v1859
      %v1875 = vadd.f32 %v1854, %v1859
      %v1876 = vadd.f32 %v1436, %v1860
      %v1877 = vadd.f32 %v1437, %v1861
      %v1878 = vadd.f32 %v1438, %v1862
      %v1879 = vadd.f32 %v1439, %v1863
      %v1880 = vadd.f32 %v1440, %v1864
      %v1881 = vadd.f32 %v1441, %v1865
      %v1882 = vadd.f32 %v1442, %v1866
      %v1883 = vadd.f32 %v1443, %v1867
      %v1884 = vadd.f32 %v1444, %v1868
      %v1885 = vadd.f32 %v1445, %v1869
      %v1886 = vadd.f32 %v1446, %v1870
      %v1887 = vadd.f32 %v1447, %v1871
      %v1888 = vadd.f32 %v1448, %v1872
      %v1889 = vadd.f32 %v1449, %v1873
      %v1890 = vadd.f32 %v1450, %v1874
      %v1891 = vadd.f32 %v1451, %v1875
      %v1892 = vpack.c.bf16 %v1877, %v1876
      %v1893 = vpack.c.bf16 %v1879, %v1878
      %v1894 = vpack.c.bf16 %v1881, %v1880
      %v1895 = vpack.c.bf16 %v1883, %v1882
      %v1896 = vpack.c.bf16 %v1885, %v1884
      %v1897 = vpack.c.bf16 %v1887, %v1886
      %v1898 = vpack.c.bf16 %v1889, %v1888
      %v1899 = vpack.c.bf16 %v1891, %v1890
      %s1900 = scalar_lea.vmem %s1, 512
      %v1901 = vld [vmem:[%s1900] sm:$0xf]
      %v1902 = vld [vmem:[%s1900 + $0x4] sm:$0xf]
      %v1903 = vld [vmem:[%s1900 + $0x8] sm:$0xf]
      %v1904 = vld [vmem:[%s1900 + $0xc] sm:$0xf]
      %v1905 = vld [vmem:[%s1900 + $0x10] sm:$0xf]
      %v1906 = vld [vmem:[%s1900 + $0x14] sm:$0xf]
      %v1907 = vld [vmem:[%s1900 + $0x18] sm:$0xf]
      %v1908 = vld [vmem:[%s1900 + $0x1c] sm:$0xf]
      %v1909 = vld [vmem:[%s1900 + $0x20] sm:$0xf]
      %v1910 = vld [vmem:[%s1900 + $0x24] sm:$0xf]
      %v1911 = vld [vmem:[%s1900 + $0x28] sm:$0xf]
      %v1912 = vld [vmem:[%s1900 + $0x2c] sm:$0xf]
      %v1913 = vld [vmem:[%s1900 + $0x30] sm:$0xf]
      %v1914 = vld [vmem:[%s1900 + $0x34] sm:$0xf]
      %v1915 = vld [vmem:[%s1900 + $0x38] sm:$0xf]
      %v1916 = vld [vmem:[%s1900 + $0x3c] sm:$0xf]
      %v1917 = vld [vmem:[%s2 + $0xe] sm:$0x1]
      %v1918 = vlaneseq
      %v1919 = vshrl.u32 %v1918, 7
      %v1920 = vsub.s32 0, %v1919
      %v1921 = vrot.slane %v1917, %v1920
      %v1938 = vunpack.c.l.b16 %v1901
      %v1939 = vunpack.c.l.b16 %v1902
      %v1940 = vunpack.c.l.b16 %v1903
      %v1941 = vunpack.c.l.b16 %v1904
      %v1942 = vunpack.c.l.b16 %v1905
      %v1943 = vunpack.c.l.b16 %v1906
      %v1944 = vunpack.c.l.b16 %v1907
      %v1945 = vunpack.c.l.b16 %v1908
      %v1946 = vunpack.c.l.b16 %v1909
      %v1947 = vunpack.c.l.b16 %v1910
      %v1948 = vunpack.c.l.b16 %v1911
      %v1949 = vunpack.c.l.b16 %v1912
      %v1950 = vunpack.c.l.b16 %v1913
      %v1951 = vunpack.c.l.b16 %v1914
      %v1952 = vunpack.c.l.b16 %v1915
      %v1953 = vunpack.c.l.b16 %v1916
      %v1954 = vpack.c.b16 %v1939, %v1938
      %v1955 = vpack.c.b16 %v1941, %v1940
      %v1956 = vpack.c.b16 %v1943, %v1942
      %v1957 = vpack.c.b16 %v1945, %v1944
      %v1958 = vpack.c.b16 %v1947, %v1946
      %v1959 = vpack.c.b16 %v1949, %v1948
      %v1960 = vpack.c.b16 %v1951, %v1950
      %v1961 = vpack.c.b16 %v1953, %v1952
      %1970 = vmatprep.subr.bf16.mxu0 0
      %1971 = vmatpush1.bf16.msra.mxu0 %v1961
      %1972 = vmatprep.subr.bf16.mxu0 0
      %1973 = vmatpush1.bf16.msra.mxu0 %v1960
      %1974 = vmatprep.subr.bf16.mxu0 0
      %1975 = vmatpush1.bf16.msra.mxu0 %v1959
      %1976 = vmatprep.subr.bf16.mxu0 0
      %1977 = vmatpush1.bf16.msra.mxu0 %v1958
      %1978 = vmatprep.subr.bf16.mxu0 0
      %1979 = vmatpush1.bf16.msra.mxu0 %v1957
      %1980 = vmatprep.subr.bf16.mxu0 0
      %1981 = vmatpush1.bf16.msra.mxu0 %v1956
      %1982 = vmatprep.subr.bf16.mxu0 0
      %1983 = vmatpush1.bf16.msra.mxu0 %v1955
      %1984 = vmatprep.subr.bf16.mxu0 0
      %1985 = vmatpush1.bf16.msra.mxu0 %v1954
      %1986 = vmatprep.subr.bf16.mxu0 0
      %1987 = vmatpush2.bf16.msra.mxu0 0
      %1988 = vmatprep.subr.bf16.mxu0 0
      %1989 = vmatpush2.bf16.msra.mxu0 0
      %1990 = vmatprep.subr.bf16.mxu0 0
      %1991 = vmatpush2.bf16.msra.mxu0 0
      %1992 = vmatprep.subr.bf16.mxu0 0
      %1993 = vmatpush2.bf16.msra.mxu0 0
      %1994 = vmatprep.subr.bf16.mxu0 0
      %1995 = vmatpush2.bf16.msra.mxu0 0
      %1996 = vmatprep.subr.bf16.mxu0 0
      %1997 = vmatpush2.bf16.msra.mxu0 0
      %1998 = vmatprep.subr.bf16.mxu0 0
      %1999 = vmatpush2.bf16.msra.mxu0 0
      %2000 = vmatprep.subr.bf16.mxu0 0
      %2001 = vmatpush2.bf16.msra.mxu0 0
      %2002 = vmatprep.mubr.bf16.mxu0 0
      %2003 = vmatmul.mubr.bf16.gmra.mxu0 %v1892
      %v2004 = vpop.f32.mrf.mxu0
      %v2005 = vadd.f32 %v1921, %v2004
      %v2006 = vpop.f32.mrf.mxu0
      %v2007 = vpop.f32.mrf.mxu0
      %v2008 = vadd.f32 %v1921, %v2007
      %v2009 = vpop.f32.mrf.mxu0
      %2010 = vmatprep.mubr.bf16.mxu0 0
      %2011 = vmatmul.mubr.bf16.gmra.mxu0 %v1893
      %v2012 = vpop.f32.mrf.mxu0
      %v2013 = vadd.f32 %v1921, %v2012
      %v2014 = vpop.f32.mrf.mxu0
      %v2015 = vpop.f32.mrf.mxu0
      %v2016 = vadd.f32 %v1921, %v2015
      %v2017 = vpop.f32.mrf.mxu0
      %2018 = vmatprep.mubr.bf16.mxu0 0
      %2019 = vmatmul.mubr.bf16.gmra.mxu0 %v1894
      %v2020 = vpop.f32.mrf.mxu0
      %v2021 = vadd.f32 %v1921, %v2020
      %v2022 = vpop.f32.mrf.mxu0
      %v2023 = vpop.f32.mrf.mxu0
      %v2024 = vadd.f32 %v1921, %v2023
      %v2025 = vpop.f32.mrf.mxu0
      %2026 = vmatprep.mubr.bf16.mxu0 0
      %2027 = vmatmul.mubr.bf16.gmra.mxu0 %v1895
      %v2028 = vpop.f32.mrf.mxu0
      %v2029 = vadd.f32 %v1921, %v2028
      %v2030 = vpop.f32.mrf.mxu0
      %v2031 = vpop.f32.mrf.mxu0
      %v2032 = vadd.f32 %v1921, %v2031
      %v2033 = vpop.f32.mrf.mxu0
      %2034 = vmatprep.mubr.bf16.mxu0 0
      %2035 = vmatmul.mubr.bf16.gmra.mxu0 %v1896
      %v2036 = vpop.f32.mrf.mxu0
      %v2037 = vadd.f32 %v1921, %v2036
      %v2038 = vpop.f32.mrf.mxu0
      %v2039 = vpop.f32.mrf.mxu0
      %v2040 = vadd.f32 %v1921, %v2039
      %v2041 = vpop.f32.mrf.mxu0
      %2042 = vmatprep.mubr.bf16.mxu0 0
      %2043 = vmatmul.mubr.bf16.gmra.mxu0 %v1897
      %v2044 = vpop.f32.mrf.mxu0
      %v2045 = vadd.f32 %v1921, %v2044
      %v2046 = vpop.f32.mrf.mxu0
      %v2047 = vpop.f32.mrf.mxu0
      %v2048 = vadd.f32 %v1921, %v2047
      %v2049 = vpop.f32.mrf.mxu0
      %2050 = vmatprep.mubr.bf16.mxu0 0
      %2051 = vmatmul.mubr.bf16.gmra.mxu0 %v1898
      %v2052 = vpop.f32.mrf.mxu0
      %v2053 = vadd.f32 %v1921, %v2052
      %v2054 = vpop.f32.mrf.mxu0
      %v2055 = vpop.f32.mrf.mxu0
      %v2056 = vadd.f32 %v1921, %v2055
      %v2057 = vpop.f32.mrf.mxu0
      %2058 = vmatprep.mubr.bf16.mxu0 0
      %2059 = vmatmul.mubr.bf16.gmra.mxu0 %v1899
      %v2060 = vpop.f32.mrf.mxu0
      %v2061 = vadd.f32 %v1921, %v2060
      %v2062 = vpop.f32.mrf.mxu0
      %v2063 = vpop.f32.mrf.mxu0
      %v2064 = vadd.f32 %v1921, %v2063
      %v2065 = vpop.f32.mrf.mxu0
      %2066 = vdwg.mxu0
      %v2067 = vmax.f32 %v2005, 0.0
      %v2068 = vmax.f32 %v2008, 0.0
      %v2069 = vmax.f32 %v2013, 0.0
      %v2070 = vmax.f32 %v2016, 0.0
      %v2071 = vmax.f32 %v2021, 0.0
      %v2072 = vmax.f32 %v2024, 0.0
      %v2073 = vmax.f32 %v2029, 0.0
      %v2074 = vmax.f32 %v2032, 0.0
      %v2075 = vmax.f32 %v2037, 0.0
      %v2076 = vmax.f32 %v2040, 0.0
      %v2077 = vmax.f32 %v2045, 0.0
      %v2078 = vmax.f32 %v2048, 0.0
      %v2079 = vmax.f32 %v2053, 0.0
      %v2080 = vmax.f32 %v2056, 0.0
      %v2081 = vmax.f32 %v2061, 0.0
      %v2082 = vmax.f32 %v2064, 0.0
      %v2083 = vpack.c.bf16 %v2068, %v2067
      %v2084 = vpack.c.bf16 %v2070, %v2069
      %v2085 = vpack.c.bf16 %v2072, %v2071
      %v2086 = vpack.c.bf16 %v2074, %v2073
      %v2087 = vpack.c.bf16 %v2076, %v2075
      %v2088 = vpack.c.bf16 %v2078, %v2077
      %v2089 = vpack.c.bf16 %v2080, %v2079
      %v2090 = vpack.c.bf16 %v2082, %v2081
      %s2091 = scalar_lea.vmem %s1, 576
      %v2092 = vld [vmem:[%s2091] sm:$0xf]
      %v2093 = vld [vmem:[%s2091 + $0x4] sm:$0xf]
      %v2094 = vld [vmem:[%s2091 + $0x8] sm:$0xf]
      %v2095 = vld [vmem:[%s2091 + $0xc] sm:$0xf]
      %v2096 = vld [vmem:[%s2091 + $0x10] sm:$0xf]
      %v2097 = vld [vmem:[%s2091 + $0x14] sm:$0xf]
      %v2098 = vld [vmem:[%s2091 + $0x18] sm:$0xf]
      %v2099 = vld [vmem:[%s2091 + $0x1c] sm:$0xf]
      %v2100 = vld [vmem:[%s2091 + $0x20] sm:$0xf]
      %v2101 = vld [vmem:[%s2091 + $0x24] sm:$0xf]
      %v2102 = vld [vmem:[%s2091 + $0x28] sm:$0xf]
      %v2103 = vld [vmem:[%s2091 + $0x2c] sm:$0xf]
      %v2104 = vld [vmem:[%s2091 + $0x30] sm:$0xf]
      %v2105 = vld [vmem:[%s2091 + $0x34] sm:$0xf]
      %v2106 = vld [vmem:[%s2091 + $0x38] sm:$0xf]
      %v2107 = vld [vmem:[%s2091 + $0x3c] sm:$0xf]
      %v2108 = vld [vmem:[%s2 + $0xf] sm:$0x1]
      %v2109 = vlaneseq
      %v2110 = vshrl.u32 %v2109, 7
      %v2111 = vsub.s32 0, %v2110
      %v2112 = vrot.slane %v2108, %v2111
      %v2129 = vunpack.c.l.b16 %v2092
      %v2130 = vunpack.c.l.b16 %v2093
      %v2131 = vunpack.c.l.b16 %v2094
      %v2132 = vunpack.c.l.b16 %v2095
      %v2133 = vunpack.c.l.b16 %v2096
      %v2134 = vunpack.c.l.b16 %v2097
      %v2135 = vunpack.c.l.b16 %v2098
      %v2136 = vunpack.c.l.b16 %v2099
      %v2137 = vunpack.c.l.b16 %v2100
      %v2138 = vunpack.c.l.b16 %v2101
      %v2139 = vunpack.c.l.b16 %v2102
      %v2140 = vunpack.c.l.b16 %v2103
      %v2141 = vunpack.c.l.b16 %v2104
      %v2142 = vunpack.c.l.b16 %v2105
      %v2143 = vunpack.c.l.b16 %v2106
      %v2144 = vunpack.c.l.b16 %v2107
      %v2145 = vpack.c.b16 %v2130, %v2129
      %v2146 = vpack.c.b16 %v2132, %v2131
      %v2147 = vpack.c.b16 %v2134, %v2133
      %v2148 = vpack.c.b16 %v2136, %v2135
      %v2149 = vpack.c.b16 %v2138, %v2137
      %v2150 = vpack.c.b16 %v2140, %v2139
      %v2151 = vpack.c.b16 %v2142, %v2141
      %v2152 = vpack.c.b16 %v2144, %v2143
      %2161 = vmatprep.subr.bf16.mxu0 0
      %2162 = vmatpush1.bf16.msra.mxu0 %v2152
      %2163 = vmatprep.subr.bf16.mxu0 0
      %2164 = vmatpush1.bf16.msra.mxu0 %v2151
      %2165 = vmatprep.subr.bf16.mxu0 0
      %2166 = vmatpush1.bf16.msra.mxu0 %v2150
      %2167 = vmatprep.subr.bf16.mxu0 0
      %2168 = vmatpush1.bf16.msra.mxu0 %v2149
      %2169 = vmatprep.subr.bf16.mxu0 0
      %2170 = vmatpush1.bf16.msra.mxu0 %v2148
      %2171 = vmatprep.subr.bf16.mxu0 0
      %2172 = vmatpush1.bf16.msra.mxu0 %v2147
      %2173 = vmatprep.subr.bf16.mxu0 0
      %2174 = vmatpush1.bf16.msra.mxu0 %v2146
      %2175 = vmatprep.subr.bf16.mxu0 0
      %2176 = vmatpush1.bf16.msra.mxu0 %v2145
      %2177 = vmatprep.subr.bf16.mxu0 0
      %2178 = vmatpush2.bf16.msra.mxu0 0
      %2179 = vmatprep.subr.bf16.mxu0 0
      %2180 = vmatpush2.bf16.msra.mxu0 0
      %2181 = vmatprep.subr.bf16.mxu0 0
      %2182 = vmatpush2.bf16.msra.mxu0 0
      %2183 = vmatprep.subr.bf16.mxu0 0
      %2184 = vmatpush2.bf16.msra.mxu0 0
      %2185 = vmatprep.subr.bf16.mxu0 0
      %2186 = vmatpush2.bf16.msra.mxu0 0
      %2187 = vmatprep.subr.bf16.mxu0 0
      %2188 = vmatpush2.bf16.msra.mxu0 0
      %2189 = vmatprep.subr.bf16.mxu0 0
      %2190 = vmatpush2.bf16.msra.mxu0 0
      %2191 = vmatprep.subr.bf16.mxu0 0
      %2192 = vmatpush2.bf16.msra.mxu0 0
      %2193 = vmatprep.mubr.bf16.mxu0 0
      %2194 = vmatmul.mubr.bf16.gmra.mxu0 %v2083
      %v2195 = vpop.f32.mrf.mxu0
      %v2196 = vadd.f32 %v2112, %v2195
      %v2197 = vpop.f32.mrf.mxu0
      %v2198 = vpop.f32.mrf.mxu0
      %v2199 = vadd.f32 %v2112, %v2198
      %v2200 = vpop.f32.mrf.mxu0
      %2201 = vmatprep.mubr.bf16.mxu0 0
      %2202 = vmatmul.mubr.bf16.gmra.mxu0 %v2084
      %v2203 = vpop.f32.mrf.mxu0
      %v2204 = vadd.f32 %v2112, %v2203
      %v2205 = vpop.f32.mrf.mxu0
      %v2206 = vpop.f32.mrf.mxu0
      %v2207 = vadd.f32 %v2112, %v2206
      %v2208 = vpop.f32.mrf.mxu0
      %2209 = vmatprep.mubr.bf16.mxu0 0
      %2210 = vmatmul.mubr.bf16.gmra.mxu0 %v2085
      %v2211 = vpop.f32.mrf.mxu0
      %v2212 = vadd.f32 %v2112, %v2211
      %v2213 = vpop.f32.mrf.mxu0
      %v2214 = vpop.f32.mrf.mxu0
      %v2215 = vadd.f32 %v2112, %v2214
      %v2216 = vpop.f32.mrf.mxu0
      %2217 = vmatprep.mubr.bf16.mxu0 0
      %2218 = vmatmul.mubr.bf16.gmra.mxu0 %v2086
      %v2219 = vpop.f32.mrf.mxu0
      %v2220 = vadd.f32 %v2112, %v2219
      %v2221 = vpop.f32.mrf.mxu0
      %v2222 = vpop.f32.mrf.mxu0
      %v2223 = vadd.f32 %v2112, %v2222
      %v2224 = vpop.f32.mrf.mxu0
      %2225 = vmatprep.mubr.bf16.mxu0 0
      %2226 = vmatmul.mubr.bf16.gmra.mxu0 %v2087
      %v2227 = vpop.f32.mrf.mxu0
      %v2228 = vadd.f32 %v2112, %v2227
      %v2229 = vpop.f32.mrf.mxu0
      %v2230 = vpop.f32.mrf.mxu0
      %v2231 = vadd.f32 %v2112, %v2230
      %v2232 = vpop.f32.mrf.mxu0
      %2233 = vmatprep.mubr.bf16.mxu0 0
      %2234 = vmatmul.mubr.bf16.gmra.mxu0 %v2088
      %v2235 = vpop.f32.mrf.mxu0
      %v2236 = vadd.f32 %v2112, %v2235
      %v2237 = vpop.f32.mrf.mxu0
      %v2238 = vpop.f32.mrf.mxu0
      %v2239 = vadd.f32 %v2112, %v2238
      %v2240 = vpop.f32.mrf.mxu0
      %2241 = vmatprep.mubr.bf16.mxu0 0
      %2242 = vmatmul.mubr.bf16.gmra.mxu0 %v2089
      %v2243 = vpop.f32.mrf.mxu0
      %v2244 = vadd.f32 %v2112, %v2243
      %v2245 = vpop.f32.mrf.mxu0
      %v2246 = vpop.f32.mrf.mxu0
      %v2247 = vadd.f32 %v2112, %v2246
      %v2248 = vpop.f32.mrf.mxu0
      %2249 = vmatprep.mubr.bf16.mxu0 0
      %2250 = vmatmul.mubr.bf16.gmra.mxu0 %v2090
      %v2251 = vpop.f32.mrf.mxu0
      %v2252 = vadd.f32 %v2112, %v2251
      %v2253 = vpop.f32.mrf.mxu0
      %v2254 = vpop.f32.mrf.mxu0
      %v2255 = vadd.f32 %v2112, %v2254
      %v2256 = vpop.f32.mrf.mxu0
      %2257 = vdwg.mxu0
      %v2258 = vmax.f32 %v2196, 0.0
      %v2259 = vmax.f32 %v2199, 0.0
      %v2260 = vmax.f32 %v2204, 0.0
      %v2261 = vmax.f32 %v2207, 0.0
      %v2262 = vmax.f32 %v2212, 0.0
      %v2263 = vmax.f32 %v2215, 0.0
      %v2264 = vmax.f32 %v2220, 0.0
      %v2265 = vmax.f32 %v2223, 0.0
      %v2266 = vmax.f32 %v2228, 0.0
      %v2267 = vmax.f32 %v2231, 0.0
      %v2268 = vmax.f32 %v2236, 0.0
      %v2269 = vmax.f32 %v2239, 0.0
      %v2270 = vmax.f32 %v2244, 0.0
      %v2271 = vmax.f32 %v2247, 0.0
      %v2272 = vmax.f32 %v2252, 0.0
      %v2273 = vmax.f32 %v2255, 0.0
      %v2274 = vld [vmem:[%s2 + $0x10] sm:$0x1]
      %v2275 = vlaneseq
      %v2276 = vshrl.u32 %v2275, 7
      %v2277 = vsub.s32 0, %v2276
      %v2278 = vrot.slane %v2274, %v2277
      %v2279 = vmul.f32 %v2258, %v2278
      %v2280 = vmul.f32 %v2259, %v2278
      %v2281 = vmul.f32 %v2260, %v2278
      %v2282 = vmul.f32 %v2261, %v2278
      %v2283 = vmul.f32 %v2262, %v2278
      %v2284 = vmul.f32 %v2263, %v2278
      %v2285 = vmul.f32 %v2264, %v2278
      %v2286 = vmul.f32 %v2265, %v2278
      %v2287 = vmul.f32 %v2266, %v2278
      %v2288 = vmul.f32 %v2267, %v2278
      %v2289 = vmul.f32 %v2268, %v2278
      %v2290 = vmul.f32 %v2269, %v2278
      %v2291 = vmul.f32 %v2270, %v2278
      %v2292 = vmul.f32 %v2271, %v2278
      %v2293 = vmul.f32 %v2272, %v2278
      %v2294 = vmul.f32 %v2273, %v2278
      %v2295 = vld [vmem:[%s2 + $0x11] sm:$0x1]
      %v2296 = vlaneseq
      %v2297 = vshrl.u32 %v2296, 7
      %v2298 = vsub.s32 0, %v2297
      %v2299 = vrot.slane %v2295, %v2298
      %v2300 = vadd.f32 %v2279, %v2299
      %v2301 = vadd.f32 %v2280, %v2299
      %v2302 = vadd.f32 %v2281, %v2299
      %v2303 = vadd.f32 %v2282, %v2299
      %v2304 = vadd.f32 %v2283, %v2299
      %v2305 = vadd.f32 %v2284, %v2299
      %v2306 = vadd.f32 %v2285, %v2299
      %v2307 = vadd.f32 %v2286, %v2299
      %v2308 = vadd.f32 %v2287, %v2299
      %v2309 = vadd.f32 %v2288, %v2299
      %v2310 = vadd.f32 %v2289, %v2299
      %v2311 = vadd.f32 %v2290, %v2299
      %v2312 = vadd.f32 %v2291, %v2299
      %v2313 = vadd.f32 %v2292, %v2299
      %v2314 = vadd.f32 %v2293, %v2299
      %v2315 = vadd.f32 %v2294, %v2299
      %v2316 = vadd.f32 %v1876, %v2300
      %v2317 = vadd.f32 %v1877, %v2301
      %v2318 = vadd.f32 %v1878, %v2302
      %v2319 = vadd.f32 %v1879, %v2303
      %v2320 = vadd.f32 %v1880, %v2304
      %v2321 = vadd.f32 %v1881, %v2305
      %v2322 = vadd.f32 %v1882, %v2306
      %v2323 = vadd.f32 %v1883, %v2307
      %v2324 = vadd.f32 %v1884, %v2308
      %v2325 = vadd.f32 %v1885, %v2309
      %v2326 = vadd.f32 %v1886, %v2310
      %v2327 = vadd.f32 %v1887, %v2311
      %v2328 = vadd.f32 %v1888, %v2312
      %v2329 = vadd.f32 %v1889, %v2313
      %v2330 = vadd.f32 %v1890, %v2314
      %v2331 = vadd.f32 %v1891, %v2315
      %v2332 = vld [vmem:[%s2 + $0x12] sm:$0x1]
      %v2333 = vlaneseq
      %v2334 = vshrl.u32 %v2333, 7
      %v2335 = vsub.s32 0, %v2334
      %v2336 = vrot.slane %v2332, %v2335
      %v2337 = vmul.f32 %v2316, %v2336
      %v2338 = vmul.f32 %v2317, %v2336
      %v2339 = vmul.f32 %v2318, %v2336
      %v2340 = vmul.f32 %v2319, %v2336
      %v2341 = vmul.f32 %v2320, %v2336
      %v2342 = vmul.f32 %v2321, %v2336
      %v2343 = vmul.f32 %v2322, %v2336
      %v2344 = vmul.f32 %v2323, %v2336
      %v2345 = vmul.f32 %v2324, %v2336
      %v2346 = vmul.f32 %v2325, %v2336
      %v2347 = vmul.f32 %v2326, %v2336
      %v2348 = vmul.f32 %v2327, %v2336
      %v2349 = vmul.f32 %v2328, %v2336
      %v2350 = vmul.f32 %v2329, %v2336
      %v2351 = vmul.f32 %v2330, %v2336
      %v2352 = vmul.f32 %v2331, %v2336
      %v2353 = vld [vmem:[%s2 + $0x13] sm:$0x1]
      %v2354 = vlaneseq
      %v2355 = vshrl.u32 %v2354, 7
      %v2356 = vsub.s32 0, %v2355
      %v2357 = vrot.slane %v2353, %v2356
      %v2358 = vadd.f32 %v2337, %v2357
      %v2359 = vadd.f32 %v2338, %v2357
      %v2360 = vadd.f32 %v2339, %v2357
      %v2361 = vadd.f32 %v2340, %v2357
      %v2362 = vadd.f32 %v2341, %v2357
      %v2363 = vadd.f32 %v2342, %v2357
      %v2364 = vadd.f32 %v2343, %v2357
      %v2365 = vadd.f32 %v2344, %v2357
      %v2366 = vadd.f32 %v2345, %v2357
      %v2367 = vadd.f32 %v2346, %v2357
      %v2368 = vadd.f32 %v2347, %v2357
      %v2369 = vadd.f32 %v2348, %v2357
      %v2370 = vadd.f32 %v2349, %v2357
      %v2371 = vadd.f32 %v2350, %v2357
      %v2372 = vadd.f32 %v2351, %v2357
      %v2373 = vadd.f32 %v2352, %v2357
      %v2374 = vmax.f32 %v2358, 0.0
      %v2375 = vmax.f32 %v2359, 0.0
      %v2376 = vmax.f32 %v2360, 0.0
      %v2377 = vmax.f32 %v2361, 0.0
      %v2378 = vmax.f32 %v2362, 0.0
      %v2379 = vmax.f32 %v2363, 0.0
      %v2380 = vmax.f32 %v2364, 0.0
      %v2381 = vmax.f32 %v2365, 0.0
      %v2382 = vmax.f32 %v2366, 0.0
      %v2383 = vmax.f32 %v2367, 0.0
      %v2384 = vmax.f32 %v2368, 0.0
      %v2385 = vmax.f32 %v2369, 0.0
      %v2386 = vmax.f32 %v2370, 0.0
      %v2387 = vmax.f32 %v2371, 0.0
      %v2388 = vmax.f32 %v2372, 0.0
      %v2389 = vmax.f32 %v2373, 0.0
      %v2390 = vpack.c.bf16 %v2375, %v2374
      %v2391 = vpack.c.bf16 %v2377, %v2376
      %v2392 = vpack.c.bf16 %v2379, %v2378
      %v2393 = vpack.c.bf16 %v2381, %v2380
      %v2394 = vpack.c.bf16 %v2383, %v2382
      %v2395 = vpack.c.bf16 %v2385, %v2384
      %v2396 = vpack.c.bf16 %v2387, %v2386
      %v2397 = vpack.c.bf16 %v2389, %v2388
      %s2398 = scalar_lea.vmem %s1, 640
      %v2399 = vld [vmem:[%s2398] sm:$0xf]
      %v2400 = vld [vmem:[%s2398 + $0x4] sm:$0xf]
      %v2401 = vld [vmem:[%s2398 + $0x8] sm:$0xf]
      %v2402 = vld [vmem:[%s2398 + $0xc] sm:$0xf]
      %v2403 = vld [vmem:[%s2398 + $0x10] sm:$0xf]
      %v2404 = vld [vmem:[%s2398 + $0x14] sm:$0xf]
      %v2405 = vld [vmem:[%s2398 + $0x18] sm:$0xf]
      %v2406 = vld [vmem:[%s2398 + $0x1c] sm:$0xf]
      %v2407 = vld [vmem:[%s2398 + $0x20] sm:$0xf]
      %v2408 = vld [vmem:[%s2398 + $0x24] sm:$0xf]
      %v2409 = vld [vmem:[%s2398 + $0x28] sm:$0xf]
      %v2410 = vld [vmem:[%s2398 + $0x2c] sm:$0xf]
      %v2411 = vld [vmem:[%s2398 + $0x30] sm:$0xf]
      %v2412 = vld [vmem:[%s2398 + $0x34] sm:$0xf]
      %v2413 = vld [vmem:[%s2398 + $0x38] sm:$0xf]
      %v2414 = vld [vmem:[%s2398 + $0x3c] sm:$0xf]
      %v2415 = vld [vmem:[%s2 + $0x14] sm:$0x1]
      %v2416 = vlaneseq
      %v2417 = vshrl.u32 %v2416, 7
      %v2418 = vsub.s32 0, %v2417
      %v2419 = vrot.slane %v2415, %v2418
      %v2436 = vunpack.c.l.b16 %v2399
      %v2437 = vunpack.c.l.b16 %v2400
      %v2438 = vunpack.c.l.b16 %v2401
      %v2439 = vunpack.c.l.b16 %v2402
      %v2440 = vunpack.c.l.b16 %v2403
      %v2441 = vunpack.c.l.b16 %v2404
      %v2442 = vunpack.c.l.b16 %v2405
      %v2443 = vunpack.c.l.b16 %v2406
      %v2444 = vunpack.c.l.b16 %v2407
      %v2445 = vunpack.c.l.b16 %v2408
      %v2446 = vunpack.c.l.b16 %v2409
      %v2447 = vunpack.c.l.b16 %v2410
      %v2448 = vunpack.c.l.b16 %v2411
      %v2449 = vunpack.c.l.b16 %v2412
      %v2450 = vunpack.c.l.b16 %v2413
      %v2451 = vunpack.c.l.b16 %v2414
      %v2452 = vpack.c.b16 %v2437, %v2436
      %v2453 = vpack.c.b16 %v2439, %v2438
      %v2454 = vpack.c.b16 %v2441, %v2440
      %v2455 = vpack.c.b16 %v2443, %v2442
      %v2456 = vpack.c.b16 %v2445, %v2444
      %v2457 = vpack.c.b16 %v2447, %v2446
      %v2458 = vpack.c.b16 %v2449, %v2448
      %v2459 = vpack.c.b16 %v2451, %v2450
      %2468 = vmatprep.subr.bf16.mxu0 0
      %2469 = vmatpush1.bf16.msra.mxu0 %v2459
      %2470 = vmatprep.subr.bf16.mxu0 0
      %2471 = vmatpush1.bf16.msra.mxu0 %v2458
      %2472 = vmatprep.subr.bf16.mxu0 0
      %2473 = vmatpush1.bf16.msra.mxu0 %v2457
      %2474 = vmatprep.subr.bf16.mxu0 0
      %2475 = vmatpush1.bf16.msra.mxu0 %v2456
      %2476 = vmatprep.subr.bf16.mxu0 0
      %2477 = vmatpush1.bf16.msra.mxu0 %v2455
      %2478 = vmatprep.subr.bf16.mxu0 0
      %2479 = vmatpush1.bf16.msra.mxu0 %v2454
      %2480 = vmatprep.subr.bf16.mxu0 0
      %2481 = vmatpush1.bf16.msra.mxu0 %v2453
      %2482 = vmatprep.subr.bf16.mxu0 0
      %2483 = vmatpush1.bf16.msra.mxu0 %v2452
      %2484 = vmatprep.subr.bf16.mxu0 0
      %2485 = vmatpush2.bf16.msra.mxu0 0
      %2486 = vmatprep.subr.bf16.mxu0 0
      %2487 = vmatpush2.bf16.msra.mxu0 0
      %2488 = vmatprep.subr.bf16.mxu0 0
      %2489 = vmatpush2.bf16.msra.mxu0 0
      %2490 = vmatprep.subr.bf16.mxu0 0
      %2491 = vmatpush2.bf16.msra.mxu0 0
      %2492 = vmatprep.subr.bf16.mxu0 0
      %2493 = vmatpush2.bf16.msra.mxu0 0
      %2494 = vmatprep.subr.bf16.mxu0 0
      %2495 = vmatpush2.bf16.msra.mxu0 0
      %2496 = vmatprep.subr.bf16.mxu0 0
      %2497 = vmatpush2.bf16.msra.mxu0 0
      %2498 = vmatprep.subr.bf16.mxu0 0
      %2499 = vmatpush2.bf16.msra.mxu0 0
      %2500 = vmatprep.mubr.bf16.mxu0 0
      %2501 = vmatmul.mubr.bf16.gmra.mxu0 %v2390
      %v2502 = vpop.f32.mrf.mxu0
      %v2503 = vadd.f32 %v2419, %v2502
      %v2504 = vpop.f32.mrf.mxu0
      %v2505 = vpop.f32.mrf.mxu0
      %v2506 = vadd.f32 %v2419, %v2505
      %v2507 = vpop.f32.mrf.mxu0
      %2508 = vmatprep.mubr.bf16.mxu0 0
      %2509 = vmatmul.mubr.bf16.gmra.mxu0 %v2391
      %v2510 = vpop.f32.mrf.mxu0
      %v2511 = vadd.f32 %v2419, %v2510
      %v2512 = vpop.f32.mrf.mxu0
      %v2513 = vpop.f32.mrf.mxu0
      %v2514 = vadd.f32 %v2419, %v2513
      %v2515 = vpop.f32.mrf.mxu0
      %2516 = vmatprep.mubr.bf16.mxu0 0
      %2517 = vmatmul.mubr.bf16.gmra.mxu0 %v2392
      %v2518 = vpop.f32.mrf.mxu0
      %v2519 = vadd.f32 %v2419, %v2518
      %v2520 = vpop.f32.mrf.mxu0
      %v2521 = vpop.f32.mrf.mxu0
      %v2522 = vadd.f32 %v2419, %v2521
      %v2523 = vpop.f32.mrf.mxu0
      %2524 = vmatprep.mubr.bf16.mxu0 0
      %2525 = vmatmul.mubr.bf16.gmra.mxu0 %v2393
      %v2526 = vpop.f32.mrf.mxu0
      %v2527 = vadd.f32 %v2419, %v2526
      %v2528 = vpop.f32.mrf.mxu0
      %v2529 = vpop.f32.mrf.mxu0
      %v2530 = vadd.f32 %v2419, %v2529
      %v2531 = vpop.f32.mrf.mxu0
      %2532 = vmatprep.mubr.bf16.mxu0 0
      %2533 = vmatmul.mubr.bf16.gmra.mxu0 %v2394
      %v2534 = vpop.f32.mrf.mxu0
      %v2535 = vadd.f32 %v2419, %v2534
      %v2536 = vpop.f32.mrf.mxu0
      %v2537 = vpop.f32.mrf.mxu0
      %v2538 = vadd.f32 %v2419, %v2537
      %v2539 = vpop.f32.mrf.mxu0
      %2540 = vmatprep.mubr.bf16.mxu0 0
      %2541 = vmatmul.mubr.bf16.gmra.mxu0 %v2395
      %v2542 = vpop.f32.mrf.mxu0
      %v2543 = vadd.f32 %v2419, %v2542
      %v2544 = vpop.f32.mrf.mxu0
      %v2545 = vpop.f32.mrf.mxu0
      %v2546 = vadd.f32 %v2419, %v2545
      %v2547 = vpop.f32.mrf.mxu0
      %2548 = vmatprep.mubr.bf16.mxu0 0
      %2549 = vmatmul.mubr.bf16.gmra.mxu0 %v2396
      %v2550 = vpop.f32.mrf.mxu0
      %v2551 = vadd.f32 %v2419, %v2550
      %v2552 = vpop.f32.mrf.mxu0
      %v2553 = vpop.f32.mrf.mxu0
      %v2554 = vadd.f32 %v2419, %v2553
      %v2555 = vpop.f32.mrf.mxu0
      %2556 = vmatprep.mubr.bf16.mxu0 0
      %2557 = vmatmul.mubr.bf16.gmra.mxu0 %v2397
      %v2558 = vpop.f32.mrf.mxu0
      %v2559 = vadd.f32 %v2419, %v2558
      %v2560 = vpop.f32.mrf.mxu0
      %v2561 = vpop.f32.mrf.mxu0
      %v2562 = vadd.f32 %v2419, %v2561
      %v2563 = vpop.f32.mrf.mxu0
      %2564 = vdwg.mxu0
      %2565 = vst [vmem:[%s172] sm:$0xff] %v2503
      %2566 = vst [vmem:[%s172 + $0x8] sm:$0xff] %v2506
      %2567 = vst [vmem:[%s172 + $0x10] sm:$0xff] %v2511
      %2568 = vst [vmem:[%s172 + $0x18] sm:$0xff] %v2514
      %2569 = vst [vmem:[%s172 + $0x20] sm:$0xff] %v2519
      %2570 = vst [vmem:[%s172 + $0x28] sm:$0xff] %v2522
      %2571 = vst [vmem:[%s172 + $0x30] sm:$0xff] %v2527
      %2572 = vst [vmem:[%s172 + $0x38] sm:$0xff] %v2530
      %2573 = vst [vmem:[%s172 + $0x40] sm:$0xff] %v2535
      %2574 = vst [vmem:[%s172 + $0x48] sm:$0xff] %v2538
      %2575 = vst [vmem:[%s172 + $0x50] sm:$0xff] %v2543
      %2576 = vst [vmem:[%s172 + $0x58] sm:$0xff] %v2546
      %2577 = vst [vmem:[%s172 + $0x60] sm:$0xff] %v2551
      %2578 = vst [vmem:[%s172 + $0x68] sm:$0xff] %v2554
      %2579 = vst [vmem:[%s172 + $0x70] sm:$0xff] %v2559
      %2580 = vst [vmem:[%s172 + $0x78] sm:$0xff] %v2562
      %s2581 = smul.u32 16, %s14
      %p2582 = scmp.lt.s32.totalorder %s2581, 31
      %s2583 = scalar_select %p2582, %s2581, 31
      %s2584 = smul.addr %s2583, 8
      %s2585 = scalar_lea.vmem %s3, %s2584
      // Predicated region
      $region33: #{densenet_forward.1} parent=31 // pred_check
        %p2586 = pneg %p100
      $region34: #{densenet_forward.1} parent=31 // pred_check_branch
        %2588 = sbr.rel (%p2586) target = $region36
      $region35: #{densenet_forward.1} parent=31 // pred_region
        %s2589 = smul.u32 16, %s14
      $region36: #{densenet_forward.1} parent=31 // pred_fallthru
        _
    $region32: #{densenet_forward.1} parent=5 // pred_fallthru
      _
    %p2590 = scmp.le.s32.totalorder 2, %s9
    // Predicated region
    $region37: #{densenet_forward.1} parent=5 // pred_check
      %p2591 = pneg %p2590
    $region38: #{densenet_forward.1} parent=5 // pred_check_branch
      %2593 = sbr.rel (%p2591) target = $region40
    $region39: #{densenet_forward.1} parent=5 // pred_region
      %s2594 = ssub.s32 %s9, 2
      // Predicated region
      $region41: #{densenet_forward.1} parent=39 // pred_check
        %p2595 = pneg %p106
      $region42: #{densenet_forward.1} parent=39 // pred_check_branch
        %2597 = sbr.rel (%p2595) target = $region44
      $region43: #{densenet_forward.1} parent=39 // pred_region
        %s2598 = smul.u32 16, %s15
        %p2599 = scmp.lt.s32.totalorder %s2598, 31
        %s2600 = scalar_select %p2599, %s2598, 31
        %s2601 = smul.addr %s2600, 8
        %s2602 = scalar_lea.vmem %s3, %s2601
      $region44: #{densenet_forward.1} parent=39 // pred_fallthru
        _
    $region40: #{densenet_forward.1} parent=5 // pred_fallthru
      _
  $region6: #{densenet_forward.1} parent=0 // loop_footer
    %s13 = sadd.s32 1, %s9
  $region7: #{densenet_forward.1} parent=0 // loop_footer_branch
    %8 = sbr.rel target = $region3
  $region8: #{densenet_forward.1} parent=0 // loop_exit
    _

</llo_original>
